<compile_context>
chip_gen: v5e
topology: v5e:2x2
jax: 0.10.0
libtpu: 0.0.40
codegen_flags: <defaults>
</compile_context>

<pallas_src>
import functools

import jax
import jax.numpy as jnp
import numpy as np
from jax.experimental import pallas as pl
from jax.experimental.pallas import tpu as pltpu

EPS = 1e-5  # nn.BatchNorm2d default


# ----------------------------------------------------------------------------
# Conv-block kernel: [optional fused BN+SiLU of the previous block]
#   -> depthwise 3x3 (dilation d, zero 'same' padding) -> pointwise 1x1.
# Emits the pre-BN activation plus fully-reduced per-channel sum / sum-of-squares
# partials for the two-pass BatchNorm.  One batch element per grid step.
# Layout: channels on sublanes, flat row-major pixels (H*W) on lanes.
# ----------------------------------------------------------------------------
def _conv_block_kernel(x_ref, em_ref, in_scale_ref, in_shift_ref,
                       wdw_ref, bdw_ref, wpw_ref, bpw_ref,
                       y_ref, rs_ref, rss_ref,
                       *, H, W, Cin, Cout, d, fuse_input_act):
    HW = H * W
    f32 = jnp.float32

    # Stage the input; optionally apply the previous block's folded BN + SiLU.
    x = x_ref[...].astype(f32)                                  # (Cin, HW)
    if fuse_input_act:
        x = x * in_scale_ref[...] + in_shift_ref[...]           # (Cin, 1) bcast
        x = x * jax.nn.sigmoid(x)                               # SiLU (EUP)

    # Edge-validity masks (precomputed on the host), each (1, HW) in {0, 1}:
    #   em[0]: h >= d   em[1]: h < H-d   em[2]: w >= d   em[3]: w < W-d
    row_mask = (em_ref[0:1, :], None, em_ref[1:2, :])           # kh = 0, 1, 2
    col_mask = (em_ref[2:3, :], None, em_ref[3:4, :])           # kw = 0, 1, 2

    # Depthwise 3x3 with dilation d for all Cin channels at once: each tap is a
    # cyclic lane-roll of the flat pixel axis; out-of-image reads are masked to
    # zero (matching the conv's zero padding).  Rolls go to the XLU slot.
    wdw = wdw_ref[...]                                          # (Cin, 9)
    dw = jnp.zeros((Cin, HW), f32)
    for kh in range(3):
        for kw in range(3):
            off = (kh - 1) * d * W + (kw - 1) * d               # flat read offset
            t = x if off == 0 else pltpu.roll(x, (-off) % HW, axis=1)
            if row_mask[kh] is not None:
                t = t * row_mask[kh]                            # (1, HW) bcast
            if col_mask[kw] is not None:
                t = t * col_mask[kw]
            k = kh * 3 + kw
            dw = dw + t * wdw[:, k:k + 1]                       # (Cin, 1) bcast
    dw = dw + bdw_ref[...]                                      # depthwise bias

    # Pointwise 1x1 conv as lane-dense VPU broadcast-MACs (channel counts here
    # are far below an MXU tile; see MXU TODO above for production widths).
    wpw = wpw_ref[...]                                          # (Cout, Cin)
    y = jnp.zeros((Cout, HW), f32) + bpw_ref[...]               # (Cout, 1) bcast
    for ci in range(Cin):
        y = y + dw[ci:ci + 1, :] * wpw[:, ci:ci + 1]            # (1,HW)*(Cout,1)

    y_ref[...] = y.astype(y_ref.dtype)                          # lane-dense store

    # Fully-reduced BatchNorm partials (per output channel).
    rs_ref[...] = jnp.sum(y, axis=1, keepdims=True)             # (Cout, 1)
    rss_ref[...] = jnp.sum(y * y, axis=1, keepdims=True)        # (Cout, 1)


def _conv_block(x_flat, edge_masks, in_scale, in_shift, wdw, bdw, wpw, bpw,
                *, H, W, d, fuse_input_act):
    """x_flat: (B, Cin, H*W) f32.  Returns (y_flat, ch_sum, ch_sumsq)."""
    B, Cin, HW = x_flat.shape
    Cout = wpw.shape[0]
    kernel = functools.partial(_conv_block_kernel, H=H, W=W, Cin=Cin, Cout=Cout,
                               d=d, fuse_input_act=fuse_input_act)

    def batch_spec(c, n):          # one batch element per grid step
        return pl.BlockSpec((None, c, n), lambda b: (b, 0, 0))

    def const_spec(a):             # full array, constant across the grid
        nd = a.ndim
        return pl.BlockSpec(a.shape, lambda b: (0,) * nd)

    return pl.pallas_call(
        kernel,
        grid=(B,),
        in_specs=[batch_spec(Cin, HW),
                  const_spec(edge_masks), const_spec(in_scale),
                  const_spec(in_shift), const_spec(wdw), const_spec(bdw),
                  const_spec(wpw), const_spec(bpw)],
        out_specs=[batch_spec(Cout, HW),
                   batch_spec(Cout, 1),
                   batch_spec(Cout, 1)],
        out_shape=(
            jax.ShapeDtypeStruct((B, Cout, HW), jnp.float32),
            jax.ShapeDtypeStruct((B, Cout, 1), jnp.float32),
            jax.ShapeDtypeStruct((B, Cout, 1), jnp.float32),
        ),
        compiler_params=pltpu.CompilerParams(
            dimension_semantics=("parallel",)),
    )(x_flat, edge_masks, in_scale, in_shift, wdw, bdw, wpw, bpw)


# ----------------------------------------------------------------------------
# Fold batch statistics (training-mode BN, biased variance) into scale/shift.
# Only a tiny (B, C, 1) sum runs in XLA; the spatial reduce happened in-kernel.
# ----------------------------------------------------------------------------
def _fold_bn(rs, rss, gamma, beta, count):
    s = jnp.sum(rs, axis=(0, 2))                   # (C,)
    ss = jnp.sum(rss, axis=(0, 2))                 # (C,)
    mean = s / count
    var = ss / count - mean * mean                 # biased variance
    scale = gamma * jax.lax.rsqrt(var + EPS)
    shift = beta - mean * scale
    return scale, shift


def _edge_masks(H, W, d):
    """(4, H*W) f32 validity masks for the +-d row/col taps (host precompute)."""
    p = np.arange(H * W)
    h, w = p // W, p % W
    m = np.stack([h >= d, h < H - d, w >= d, w < W - d]).astype(np.float32)
    return jnp.asarray(m)


# ----------------------------------------------------------------------------
# Module wrapper (NCHW in / NCHW out, like the PyTorch module)
# ----------------------------------------------------------------------------
def double_conv_dwsep_with_dilation(x_nchw, params, dilation):
    d = int(dilation)
    B, _, H, W = x_nchw.shape
    count = float(B * H * W)
    em = _edge_masks(H, W, d)

    # Zero-copy NCHW -> (B, C, H*W) flatten; H*W=256 here (multiple of 128).
    x = jnp.asarray(x_nchw, jnp.float32).reshape(B, -1, H * W)
    scale = shift = None
    for p in params:                                            # two conv blocks
        cin = p["wdw_oihw"].shape[0]
        cout = p["wpw_oihw"].shape[0]
        wdw = p["wdw_oihw"][:, 0].reshape(cin, 9)               # (Cin,1,3,3)->(Cin,9)
        bdw = p["bdw"].reshape(cin, 1)
        wpw = p["wpw_oihw"][:, :, 0, 0]                         # (Cout,Cin,1,1)->(Cout,Cin)
        bpw = p["bpw"].reshape(cout, 1)
        if scale is None:                                       # first block: raw input
            in_scale = jnp.ones((cin, 1), jnp.float32)
            in_shift = jnp.zeros((cin, 1), jnp.float32)
            fuse = False
        else:                                                   # fuse previous BN+SiLU
            in_scale = scale.reshape(cin, 1)
            in_shift = shift.reshape(cin, 1)
            fuse = True
        x, rs, rss = _conv_block(x, em, in_scale, in_shift, wdw, bdw, wpw, bpw,
                                 H=H, W=W, d=d, fuse_input_act=fuse)
        scale, shift = _fold_bn(rs, rss, p["gamma"], p["beta"], count)

    # Final BatchNorm + SiLU as a plain-jnp epilogue (XLA fuses it; no extra
    # lane-sparse Pallas pass / per-step overhead).
    z = x * scale[None, :, None] + shift[None, :, None]
    z = z * jax.nn.sigmoid(z)
    return z.reshape(B, -1, H, W)


# ----------------------------------------------------------------------------
# Deterministic parameter init (PyTorch shapes; BN weight=1, bias=0)
# ----------------------------------------------------------------------------
def init_params(key, in_c, mid_c, out_c):
    def block(k, cin, cout):
        k1, k2, k3, k4 = jax.random.split(k, 4)
        return dict(
            wdw_oihw=0.2 * jax.random.normal(k1, (cin, 1, 3, 3), jnp.float32),
            bdw=0.1 * jax.random.normal(k2, (cin,), jnp.float32),
            wpw_oihw=0.2 * jax.random.normal(k3, (cout, cin, 1, 1), jnp.float32),
            bpw=0.1 * jax.random.normal(k4, (cout,), jnp.float32),
            gamma=jnp.ones((cout,), jnp.float32),
            beta=jnp.zeros((cout,), jnp.float32),
        )
    k1, k2 = jax.random.split(key)
    return [block(k1, in_c, mid_c), block(k2, mid_c, out_c)]


# ----------------------------------------------------------------------------
# Plain-JAX reference (lax.conv) for verification
# ----------------------------------------------------------------------------
def _ref_block(x_nchw, p, d):
    cin = x_nchw.shape[1]
    y = jax.lax.conv_general_dilated(
        x_nchw, p["wdw_oihw"], window_strides=(1, 1),
        padding=((d, d), (d, d)), rhs_dilation=(d, d),
        dimension_numbers=("NCHW", "OIHW", "NCHW"),
        feature_group_count=cin)
    y = y + p["bdw"][None, :, None, None]
    y = jax.lax.conv_general_dilated(
        y, p["wpw_oihw"], window_strides=(1, 1), padding="VALID",
        dimension_numbers=("NCHW", "OIHW", "NCHW"))
    y = y + p["bpw"][None, :, None, None]
    mean = y.mean(axis=(0, 2, 3), keepdims=True)
    var = ((y - mean) ** 2).mean(axis=(0, 2, 3), keepdims=True)
    z = (y - mean) / jnp.sqrt(var + EPS)
    z = z * p["gamma"][None, :, None, None] + p["beta"][None, :, None, None]
    return z * jax.nn.sigmoid(z)


def ref_forward(x_nchw, params, d):
    y = x_nchw
    for p in params:
        y = _ref_block(y, p, d)
    return y


if __name__ == "__main__":
    key = jax.random.PRNGKey(0)
    B, Cin, H, W = 2, 4, 16, 16
    Cmid = Cout = 8
    dilation = 2

    kx, kp = jax.random.split(key)
    x = jax.random.normal(kx, (B, Cin, H, W), jnp.float32)
    params = init_params(kp, Cin, Cmid, Cout)

    fwd = jax.jit(functools.partial(double_conv_dwsep_with_dilation,
                                    dilation=dilation))
    out = fwd(x, params)
    out = jax.block_until_ready(out)
    assert out.shape == (B, Cout, H, W) and out.dtype == jnp.float32

    ref = ref_forward(x, params, dilation)
    np.testing.assert_allclose(np.asarray(out), np.asarray(ref), rtol=1e-3, atol=1e-3)

    print("KERNEL_OK")
</pallas_src>

<mosaic_0001>
module attributes {stable_mosaic.version = 11 : i64} {
  func.func @_conv_block_kernel(%arg0: i32, %arg1: memref<1x4x256xf32, #tpu.memory_space<vmem>>, %arg2: memref<4x256xf32, #tpu.memory_space<vmem>>, %arg3: memref<4x1xf32, #tpu.memory_space<vmem>>, %arg4: memref<4x1xf32, #tpu.memory_space<vmem>>, %arg5: memref<4x9xf32, #tpu.memory_space<vmem>>, %arg6: memref<4x1xf32, #tpu.memory_space<vmem>>, %arg7: memref<8x4xf32, #tpu.memory_space<vmem>>, %arg8: memref<8x1xf32, #tpu.memory_space<vmem>>, %arg9: memref<1x8x256xf32, #tpu.memory_space<vmem>>, %arg10: memref<1x8x1xf32, #tpu.memory_space<vmem>>, %arg11: memref<1x8x1xf32, #tpu.memory_space<vmem>>) attributes {dimension_semantics = [#tpu.dimension_semantics<parallel>], iteration_bounds = array<i64: 2>, scalar_prefetch = 0 : i64, scratch_operands = 0 : i64, tpu.core_type = #tpu.core_type<tc>, window_params = [{transform_indices = @transform_0, window_bounds = array<i64: 1, 4, 256>}, {pipeline_mode = #tpu.pipeline_mode<synchronous>, transform_indices = @transform_1, window_bounds = array<i64: 4, 256>}, {pipeline_mode = #tpu.pipeline_mode<synchronous>, transform_indices = @transform_2, window_bounds = array<i64: 4, 1>}, {pipeline_mode = #tpu.pipeline_mode<synchronous>, transform_indices = @transform_3, window_bounds = array<i64: 4, 1>}, {pipeline_mode = #tpu.pipeline_mode<synchronous>, transform_indices = @transform_4, window_bounds = array<i64: 4, 9>}, {pipeline_mode = #tpu.pipeline_mode<synchronous>, transform_indices = @transform_5, window_bounds = array<i64: 4, 1>}, {pipeline_mode = #tpu.pipeline_mode<synchronous>, transform_indices = @transform_6, window_bounds = array<i64: 8, 4>}, {pipeline_mode = #tpu.pipeline_mode<synchronous>, transform_indices = @transform_7, window_bounds = array<i64: 8, 1>}, {transform_indices = @transform_8, window_bounds = array<i64: 1, 8, 256>}, {transform_indices = @transform_9, window_bounds = array<i64: 1, 8, 1>}, {transform_indices = @transform_10, window_bounds = array<i64: 1, 8, 1>}]} {
    %c0 = arith.constant 0 : index
    %c0_0 = arith.constant 0 : index
    %c0_1 = arith.constant 0 : index
    %0 = vector.load %arg1[%c0, %c0_0, %c0_1] : memref<1x4x256xf32, #tpu.memory_space<vmem>>, vector<1x4x256xf32>
    %1 = vector.shape_cast %0 : vector<1x4x256xf32> to vector<4x256xf32>
    %c0_2 = arith.constant 0 : index
    %c0_3 = arith.constant 0 : index
    %2 = vector.load %arg2[%c0_2, %c0_3] : memref<4x256xf32, #tpu.memory_space<vmem>>, vector<1x256xf32>
    %c1 = arith.constant 1 : index
    %c0_4 = arith.constant 0 : index
    %3 = vector.load %arg2[%c1, %c0_4] : memref<4x256xf32, #tpu.memory_space<vmem>>, vector<1x256xf32>
    %c2 = arith.constant 2 : index
    %c0_5 = arith.constant 0 : index
    %4 = vector.load %arg2[%c2, %c0_5] : memref<4x256xf32, #tpu.memory_space<vmem>>, vector<1x256xf32>
    %c3 = arith.constant 3 : index
    %c0_6 = arith.constant 0 : index
    %5 = vector.load %arg2[%c3, %c0_6] : memref<4x256xf32, #tpu.memory_space<vmem>>, vector<1x256xf32>
    %c0_7 = arith.constant 0 : index
    %c0_8 = arith.constant 0 : index
    %6 = vector.load %arg5[%c0_7, %c0_8] : memref<4x9xf32, #tpu.memory_space<vmem>>, vector<4x9xf32>
    %cst = arith.constant 0.000000e+00 : f32
    %7 = vector.broadcast %cst : f32 to vector<4x256xf32>
    %c34_i32 = arith.constant 34 : i32
    %8 = tpu.dynamic_rotate %1 by %c34_i32 dim 1 : vector<4x256xf32>, i32 -> vector<4x256xf32>
    %9 = vector.broadcast %2 : vector<1x256xf32> to vector<4x256xf32>
    %10 = arith.mulf %8, %9 : vector<4x256xf32>
    %11 = vector.broadcast %4 : vector<1x256xf32> to vector<4x256xf32>
    %12 = arith.mulf %10, %11 : vector<4x256xf32>
    %13 = vector.extract_strided_slice %6 {offsets = [0, 0], sizes = [4, 1], strides = [1, 1]} : vector<4x9xf32> to vector<4x1xf32>
    %14 = vector.broadcast %13 : vector<4x1xf32> to vector<4x256xf32>
    %15 = arith.mulf %12, %14 : vector<4x256xf32>
    %16 = arith.addf %7, %15 : vector<4x256xf32>
    %c32_i32 = arith.constant 32 : i32
    %17 = tpu.dynamic_rotate %1 by %c32_i32 dim 1 : vector<4x256xf32>, i32 -> vector<4x256xf32>
    %18 = vector.broadcast %2 : vector<1x256xf32> to vector<4x256xf32>
    %19 = arith.mulf %17, %18 : vector<4x256xf32>
    %20 = vector.extract_strided_slice %6 {offsets = [0, 1], sizes = [4, 1], strides = [1, 1]} : vector<4x9xf32> to vector<4x1xf32>
    %21 = vector.broadcast %20 : vector<4x1xf32> to vector<4x256xf32>
    %22 = arith.mulf %19, %21 : vector<4x256xf32>
    %23 = arith.addf %16, %22 : vector<4x256xf32>
    %c30_i32 = arith.constant 30 : i32
    %24 = tpu.dynamic_rotate %1 by %c30_i32 dim 1 : vector<4x256xf32>, i32 -> vector<4x256xf32>
    %25 = vector.broadcast %2 : vector<1x256xf32> to vector<4x256xf32>
    %26 = arith.mulf %24, %25 : vector<4x256xf32>
    %27 = vector.broadcast %5 : vector<1x256xf32> to vector<4x256xf32>
    %28 = arith.mulf %26, %27 : vector<4x256xf32>
    %29 = vector.extract_strided_slice %6 {offsets = [0, 2], sizes = [4, 1], strides = [1, 1]} : vector<4x9xf32> to vector<4x1xf32>
    %30 = vector.broadcast %29 : vector<4x1xf32> to vector<4x256xf32>
    %31 = arith.mulf %28, %30 : vector<4x256xf32>
    %32 = arith.addf %23, %31 : vector<4x256xf32>
    %c2_i32 = arith.constant 2 : i32
    %33 = tpu.dynamic_rotate %1 by %c2_i32 dim 1 : vector<4x256xf32>, i32 -> vector<4x256xf32>
    %34 = vector.broadcast %4 : vector<1x256xf32> to vector<4x256xf32>
    %35 = arith.mulf %33, %34 : vector<4x256xf32>
    %36 = vector.extract_strided_slice %6 {offsets = [0, 3], sizes = [4, 1], strides = [1, 1]} : vector<4x9xf32> to vector<4x1xf32>
    %37 = vector.broadcast %36 : vector<4x1xf32> to vector<4x256xf32>
    %38 = arith.mulf %35, %37 : vector<4x256xf32>
    %39 = arith.addf %32, %38 : vector<4x256xf32>
    %40 = vector.extract_strided_slice %6 {offsets = [0, 4], sizes = [4, 1], strides = [1, 1]} : vector<4x9xf32> to vector<4x1xf32>
    %41 = vector.broadcast %40 : vector<4x1xf32> to vector<4x256xf32>
    %42 = arith.mulf %1, %41 : vector<4x256xf32>
    %43 = arith.addf %39, %42 : vector<4x256xf32>
    %c254_i32 = arith.constant 254 : i32
    %44 = tpu.dynamic_rotate %1 by %c254_i32 dim 1 : vector<4x256xf32>, i32 -> vector<4x256xf32>
    %45 = vector.broadcast %5 : vector<1x256xf32> to vector<4x256xf32>
    %46 = arith.mulf %44, %45 : vector<4x256xf32>
    %47 = vector.extract_strided_slice %6 {offsets = [0, 5], sizes = [4, 1], strides = [1, 1]} : vector<4x9xf32> to vector<4x1xf32>
    %48 = vector.broadcast %47 : vector<4x1xf32> to vector<4x256xf32>
    %49 = arith.mulf %46, %48 : vector<4x256xf32>
    %50 = arith.addf %43, %49 : vector<4x256xf32>
    %c226_i32 = arith.constant 226 : i32
    %51 = tpu.dynamic_rotate %1 by %c226_i32 dim 1 : vector<4x256xf32>, i32 -> vector<4x256xf32>
    %52 = vector.broadcast %3 : vector<1x256xf32> to vector<4x256xf32>
    %53 = arith.mulf %51, %52 : vector<4x256xf32>
    %54 = vector.broadcast %4 : vector<1x256xf32> to vector<4x256xf32>
    %55 = arith.mulf %53, %54 : vector<4x256xf32>
    %56 = vector.extract_strided_slice %6 {offsets = [0, 6], sizes = [4, 1], strides = [1, 1]} : vector<4x9xf32> to vector<4x1xf32>
    %57 = vector.broadcast %56 : vector<4x1xf32> to vector<4x256xf32>
    %58 = arith.mulf %55, %57 : vector<4x256xf32>
    %59 = arith.addf %50, %58 : vector<4x256xf32>
    %c224_i32 = arith.constant 224 : i32
    %60 = tpu.dynamic_rotate %1 by %c224_i32 dim 1 : vector<4x256xf32>, i32 -> vector<4x256xf32>
    %61 = vector.broadcast %3 : vector<1x256xf32> to vector<4x256xf32>
    %62 = arith.mulf %60, %61 : vector<4x256xf32>
    %63 = vector.extract_strided_slice %6 {offsets = [0, 7], sizes = [4, 1], strides = [1, 1]} : vector<4x9xf32> to vector<4x1xf32>
    %64 = vector.broadcast %63 : vector<4x1xf32> to vector<4x256xf32>
    %65 = arith.mulf %62, %64 : vector<4x256xf32>
    %66 = arith.addf %59, %65 : vector<4x256xf32>
    %c222_i32 = arith.constant 222 : i32
    %67 = tpu.dynamic_rotate %1 by %c222_i32 dim 1 : vector<4x256xf32>, i32 -> vector<4x256xf32>
    %68 = vector.broadcast %3 : vector<1x256xf32> to vector<4x256xf32>
    %69 = arith.mulf %67, %68 : vector<4x256xf32>
    %70 = vector.broadcast %5 : vector<1x256xf32> to vector<4x256xf32>
    %71 = arith.mulf %69, %70 : vector<4x256xf32>
    %72 = vector.extract_strided_slice %6 {offsets = [0, 8], sizes = [4, 1], strides = [1, 1]} : vector<4x9xf32> to vector<4x1xf32>
    %73 = vector.broadcast %72 : vector<4x1xf32> to vector<4x256xf32>
    %74 = arith.mulf %71, %73 : vector<4x256xf32>
    %75 = arith.addf %66, %74 : vector<4x256xf32>
    %c0_9 = arith.constant 0 : index
    %c0_10 = arith.constant 0 : index
    %76 = vector.load %arg6[%c0_9, %c0_10] : memref<4x1xf32, #tpu.memory_space<vmem>>, vector<4x1xf32>
    %77 = vector.broadcast %76 : vector<4x1xf32> to vector<4x256xf32>
    %78 = arith.addf %75, %77 : vector<4x256xf32>
    %c0_11 = arith.constant 0 : index
    %c0_12 = arith.constant 0 : index
    %79 = vector.load %arg7[%c0_11, %c0_12] : memref<8x4xf32, #tpu.memory_space<vmem>>, vector<8x4xf32>
    %cst_13 = arith.constant 0.000000e+00 : f32
    %80 = vector.broadcast %cst_13 : f32 to vector<8x256xf32>
    %c0_14 = arith.constant 0 : index
    %c0_15 = arith.constant 0 : index
    %81 = vector.load %arg8[%c0_14, %c0_15] : memref<8x1xf32, #tpu.memory_space<vmem>>, vector<8x1xf32>
    %82 = vector.broadcast %81 : vector<8x1xf32> to vector<8x256xf32>
    %83 = arith.addf %80, %82 : vector<8x256xf32>
    %84 = vector.extract_strided_slice %78 {offsets = [0, 0], sizes = [1, 256], strides = [1, 1]} : vector<4x256xf32> to vector<1x256xf32>
    %85 = vector.extract_strided_slice %79 {offsets = [0, 0], sizes = [8, 1], strides = [1, 1]} : vector<8x4xf32> to vector<8x1xf32>
    %86 = vector.broadcast %84 : vector<1x256xf32> to vector<8x256xf32>
    %87 = vector.broadcast %85 : vector<8x1xf32> to vector<8x256xf32>
    %88 = arith.mulf %86, %87 : vector<8x256xf32>
    %89 = arith.addf %83, %88 : vector<8x256xf32>
    %90 = vector.extract_strided_slice %78 {offsets = [1, 0], sizes = [1, 256], strides = [1, 1]} : vector<4x256xf32> to vector<1x256xf32>
    %91 = vector.extract_strided_slice %79 {offsets = [0, 1], sizes = [8, 1], strides = [1, 1]} : vector<8x4xf32> to vector<8x1xf32>
    %92 = vector.broadcast %90 : vector<1x256xf32> to vector<8x256xf32>
    %93 = vector.broadcast %91 : vector<8x1xf32> to vector<8x256xf32>
    %94 = arith.mulf %92, %93 : vector<8x256xf32>
    %95 = arith.addf %89, %94 : vector<8x256xf32>
    %96 = vector.extract_strided_slice %78 {offsets = [2, 0], sizes = [1, 256], strides = [1, 1]} : vector<4x256xf32> to vector<1x256xf32>
    %97 = vector.extract_strided_slice %79 {offsets = [0, 2], sizes = [8, 1], strides = [1, 1]} : vector<8x4xf32> to vector<8x1xf32>
    %98 = vector.broadcast %96 : vector<1x256xf32> to vector<8x256xf32>
    %99 = vector.broadcast %97 : vector<8x1xf32> to vector<8x256xf32>
    %100 = arith.mulf %98, %99 : vector<8x256xf32>
    %101 = arith.addf %95, %100 : vector<8x256xf32>
    %102 = vector.extract_strided_slice %78 {offsets = [3, 0], sizes = [1, 256], strides = [1, 1]} : vector<4x256xf32> to vector<1x256xf32>
    %103 = vector.extract_strided_slice %79 {offsets = [0, 3], sizes = [8, 1], strides = [1, 1]} : vector<8x4xf32> to vector<8x1xf32>
    %104 = vector.broadcast %102 : vector<1x256xf32> to vector<8x256xf32>
    %105 = vector.broadcast %103 : vector<8x1xf32> to vector<8x256xf32>
    %106 = arith.mulf %104, %105 : vector<8x256xf32>
    %107 = arith.addf %101, %106 : vector<8x256xf32>
    %c0_16 = arith.constant 0 : index
    %c0_17 = arith.constant 0 : index
    %c0_18 = arith.constant 0 : index
    %108 = vector.load %arg9[%c0_16, %c0_17, %c0_18] : memref<1x8x256xf32, #tpu.memory_space<vmem>>, vector<1x8x256xf32>
    %109 = vector.shape_cast %108 : vector<1x8x256xf32> to vector<8x256xf32>
    %110 = vector.shape_cast %107 : vector<8x256xf32> to vector<1x8x256xf32>
    tpu.vector_store %arg9[%c0_16, %c0_17, %c0_18], %110 {strides = array<i32>} : memref<1x8x256xf32, #tpu.memory_space<vmem>>, vector<1x8x256xf32>,
    %cst_19 = arith.constant dense<0.000000e+00> : vector<8xf32>
    %111 = vector.multi_reduction <add>, %107, %cst_19 [1] : vector<8x256xf32> to vector<8xf32>
    %112 = vector.shape_cast %111 : vector<8xf32> to vector<8x1xf32>
    %c0_20 = arith.constant 0 : index
    %c0_21 = arith.constant 0 : index
    %c0_22 = arith.constant 0 : index
    %113 = vector.load %arg10[%c0_20, %c0_21, %c0_22] : memref<1x8x1xf32, #tpu.memory_space<vmem>>, vector<1x8x1xf32>
    %114 = vector.shape_cast %113 : vector<1x8x1xf32> to vector<8x1xf32>
    %115 = vector.shape_cast %112 : vector<8x1xf32> to vector<1x8x1xf32>
    tpu.vector_store %arg10[%c0_20, %c0_21, %c0_22], %115 {strides = array<i32>} : memref<1x8x1xf32, #tpu.memory_space<vmem>>, vector<1x8x1xf32>,
    %116 = arith.mulf %107, %107 : vector<8x256xf32>
    %cst_23 = arith.constant dense<0.000000e+00> : vector<8xf32>
    %117 = vector.multi_reduction <add>, %116, %cst_23 [1] : vector<8x256xf32> to vector<8xf32>
    %118 = vector.shape_cast %117 : vector<8xf32> to vector<8x1xf32>
    %c0_24 = arith.constant 0 : index
    %c0_25 = arith.constant 0 : index
    %c0_26 = arith.constant 0 : index
    %119 = vector.load %arg11[%c0_24, %c0_25, %c0_26] : memref<1x8x1xf32, #tpu.memory_space<vmem>>, vector<1x8x1xf32>
    %120 = vector.shape_cast %119 : vector<1x8x1xf32> to vector<8x1xf32>
    %121 = vector.shape_cast %118 : vector<8x1xf32> to vector<1x8x1xf32>
    tpu.vector_store %arg11[%c0_24, %c0_25, %c0_26], %121 {strides = array<i32>} : memref<1x8x1xf32, #tpu.memory_space<vmem>>, vector<1x8x1xf32>,
    return
  }
  func.func @transform_0(%arg0: i32) -> (i32, i32, i32) {
    %c0_i32 = arith.constant 0 : i32
    %c0_i32_0 = arith.constant 0 : i32
    %c0_i32_1 = arith.constant 0 : i32
    return %arg0, %c0_i32, %c0_i32_0 : i32, i32, i32
  }
  func.func @transform_1(%arg0: i32) -> (i32, i32) {
    %c0_i32 = arith.constant 0 : i32
    %c0_i32_0 = arith.constant 0 : i32
    %c0_i32_1 = arith.constant 0 : i32
    return %c0_i32, %c0_i32_0 : i32, i32
  }
  func.func @transform_2(%arg0: i32) -> (i32, i32) {
    %c0_i32 = arith.constant 0 : i32
    %c0_i32_0 = arith.constant 0 : i32
    %c0_i32_1 = arith.constant 0 : i32
    return %c0_i32, %c0_i32_0 : i32, i32
  }
  func.func @transform_3(%arg0: i32) -> (i32, i32) {
    %c0_i32 = arith.constant 0 : i32
    %c0_i32_0 = arith.constant 0 : i32
    %c0_i32_1 = arith.constant 0 : i32
    return %c0_i32, %c0_i32_0 : i32, i32
  }
  func.func @transform_4(%arg0: i32) -> (i32, i32) {
    %c0_i32 = arith.constant 0 : i32
    %c0_i32_0 = arith.constant 0 : i32
    %c0_i32_1 = arith.constant 0 : i32
    return %c0_i32, %c0_i32_0 : i32, i32
  }
  func.func @transform_5(%arg0: i32) -> (i32, i32) {
    %c0_i32 = arith.constant 0 : i32
    %c0_i32_0 = arith.constant 0 : i32
    %c0_i32_1 = arith.constant 0 : i32
    return %c0_i32, %c0_i32_0 : i32, i32
  }
  func.func @transform_6(%arg0: i32) -> (i32, i32) {
    %c0_i32 = arith.constant 0 : i32
    %c0_i32_0 = arith.constant 0 : i32
    %c0_i32_1 = arith.constant 0 : i32
    return %c0_i32, %c0_i32_0 : i32, i32
  }
  func.func @transform_7(%arg0: i32) -> (i32, i32) {
    %c0_i32 = arith.constant 0 : i32
    %c0_i32_0 = arith.constant 0 : i32
    %c0_i32_1 = arith.constant 0 : i32
    return %c0_i32, %c0_i32_0 : i32, i32
  }
  func.func @transform_8(%arg0: i32) -> (i32, i32, i32) {
    %c0_i32 = arith.constant 0 : i32
    %c0_i32_0 = arith.constant 0 : i32
    %c0_i32_1 = arith.constant 0 : i32
    return %arg0, %c0_i32, %c0_i32_0 : i32, i32, i32
  }
  func.func @transform_9(%arg0: i32) -> (i32, i32, i32) {
    %c0_i32 = arith.constant 0 : i32
    %c0_i32_0 = arith.constant 0 : i32
    %c0_i32_1 = arith.constant 0 : i32
    return %arg0, %c0_i32, %c0_i32_0 : i32, i32, i32
  }
  func.func @transform_10(%arg0: i32) -> (i32, i32, i32) {
    %c0_i32 = arith.constant 0 : i32
    %c0_i32_0 = arith.constant 0 : i32
    %c0_i32_1 = arith.constant 0 : i32
    return %arg0, %c0_i32, %c0_i32_0 : i32, i32, i32
  }
}

module attributes {stable_mosaic.version = 11 : i64} {
  func.func @_conv_block_kernel(%arg0: i32, %arg1: memref<1x8x256xf32, #tpu.memory_space<vmem>>, %arg2: memref<4x256xf32, #tpu.memory_space<vmem>>, %arg3: memref<8x1xf32, #tpu.memory_space<vmem>>, %arg4: memref<8x1xf32, #tpu.memory_space<vmem>>, %arg5: memref<8x9xf32, #tpu.memory_space<vmem>>, %arg6: memref<8x1xf32, #tpu.memory_space<vmem>>, %arg7: memref<8x8xf32, #tpu.memory_space<vmem>>, %arg8: memref<8x1xf32, #tpu.memory_space<vmem>>, %arg9: memref<1x8x256xf32, #tpu.memory_space<vmem>>, %arg10: memref<1x8x1xf32, #tpu.memory_space<vmem>>, %arg11: memref<1x8x1xf32, #tpu.memory_space<vmem>>) attributes {dimension_semantics = [#tpu.dimension_semantics<parallel>], iteration_bounds = array<i64: 2>, scalar_prefetch = 0 : i64, scratch_operands = 0 : i64, tpu.core_type = #tpu.core_type<tc>, window_params = [{transform_indices = @transform_0, window_bounds = array<i64: 1, 8, 256>}, {pipeline_mode = #tpu.pipeline_mode<synchronous>, transform_indices = @transform_1, window_bounds = array<i64: 4, 256>}, {pipeline_mode = #tpu.pipeline_mode<synchronous>, transform_indices = @transform_2, window_bounds = array<i64: 8, 1>}, {pipeline_mode = #tpu.pipeline_mode<synchronous>, transform_indices = @transform_3, window_bounds = array<i64: 8, 1>}, {pipeline_mode = #tpu.pipeline_mode<synchronous>, transform_indices = @transform_4, window_bounds = array<i64: 8, 9>}, {pipeline_mode = #tpu.pipeline_mode<synchronous>, transform_indices = @transform_5, window_bounds = array<i64: 8, 1>}, {pipeline_mode = #tpu.pipeline_mode<synchronous>, transform_indices = @transform_6, window_bounds = array<i64: 8, 8>}, {pipeline_mode = #tpu.pipeline_mode<synchronous>, transform_indices = @transform_7, window_bounds = array<i64: 8, 1>}, {transform_indices = @transform_8, window_bounds = array<i64: 1, 8, 256>}, {transform_indices = @transform_9, window_bounds = array<i64: 1, 8, 1>}, {transform_indices = @transform_10, window_bounds = array<i64: 1, 8, 1>}]} {
    %c0 = arith.constant 0 : index
    %c0_0 = arith.constant 0 : index
    %c0_1 = arith.constant 0 : index
    %0 = vector.load %arg1[%c0, %c0_0, %c0_1] : memref<1x8x256xf32, #tpu.memory_space<vmem>>, vector<1x8x256xf32>
    %1 = vector.shape_cast %0 : vector<1x8x256xf32> to vector<8x256xf32>
    %c0_2 = arith.constant 0 : index
    %c0_3 = arith.constant 0 : index
    %2 = vector.load %arg3[%c0_2, %c0_3] : memref<8x1xf32, #tpu.memory_space<vmem>>, vector<8x1xf32>
    %3 = vector.broadcast %2 : vector<8x1xf32> to vector<8x256xf32>
    %4 = arith.mulf %1, %3 : vector<8x256xf32>
    %c0_4 = arith.constant 0 : index
    %c0_5 = arith.constant 0 : index
    %5 = vector.load %arg4[%c0_4, %c0_5] : memref<8x1xf32, #tpu.memory_space<vmem>>, vector<8x1xf32>
    %6 = vector.broadcast %5 : vector<8x1xf32> to vector<8x256xf32>
    %7 = arith.addf %4, %6 : vector<8x256xf32>
    %8 = arith.negf %7 : vector<8x256xf32>
    %9 = math.exp %8 : vector<8x256xf32>
    %cst = arith.constant 1.000000e+00 : f32
    %10 = vector.broadcast %cst : f32 to vector<8x256xf32>
    %11 = arith.addf %10, %9 : vector<8x256xf32>
    %12 = arith.divf %10, %11 : vector<8x256xf32>
    %13 = arith.mulf %7, %12 : vector<8x256xf32>
    %c0_6 = arith.constant 0 : index
    %c0_7 = arith.constant 0 : index
    %14 = vector.load %arg2[%c0_6, %c0_7] : memref<4x256xf32, #tpu.memory_space<vmem>>, vector<1x256xf32>
    %c1 = arith.constant 1 : index
    %c0_8 = arith.constant 0 : index
    %15 = vector.load %arg2[%c1, %c0_8] : memref<4x256xf32, #tpu.memory_space<vmem>>, vector<1x256xf32>
    %c2 = arith.constant 2 : index
    %c0_9 = arith.constant 0 : index
    %16 = vector.load %arg2[%c2, %c0_9] : memref<4x256xf32, #tpu.memory_space<vmem>>, vector<1x256xf32>
    %c3 = arith.constant 3 : index
    %c0_10 = arith.constant 0 : index
    %17 = vector.load %arg2[%c3, %c0_10] : memref<4x256xf32, #tpu.memory_space<vmem>>, vector<1x256xf32>
    %c0_11 = arith.constant 0 : index
    %c0_12 = arith.constant 0 : index
    %18 = vector.load %arg5[%c0_11, %c0_12] : memref<8x9xf32, #tpu.memory_space<vmem>>, vector<8x9xf32>
    %cst_13 = arith.constant 0.000000e+00 : f32
    %19 = vector.broadcast %cst_13 : f32 to vector<8x256xf32>
    %c34_i32 = arith.constant 34 : i32
    %20 = tpu.dynamic_rotate %13 by %c34_i32 dim 1 : vector<8x256xf32>, i32 -> vector<8x256xf32>
    %21 = vector.broadcast %14 : vector<1x256xf32> to vector<8x256xf32>
    %22 = arith.mulf %20, %21 : vector<8x256xf32>
    %23 = vector.broadcast %16 : vector<1x256xf32> to vector<8x256xf32>
    %24 = arith.mulf %22, %23 : vector<8x256xf32>
    %25 = vector.extract_strided_slice %18 {offsets = [0, 0], sizes = [8, 1], strides = [1, 1]} : vector<8x9xf32> to vector<8x1xf32>
    %26 = vector.broadcast %25 : vector<8x1xf32> to vector<8x256xf32>
    %27 = arith.mulf %24, %26 : vector<8x256xf32>
    %28 = arith.addf %19, %27 : vector<8x256xf32>
    %c32_i32 = arith.constant 32 : i32
    %29 = tpu.dynamic_rotate %13 by %c32_i32 dim 1 : vector<8x256xf32>, i32 -> vector<8x256xf32>
    %30 = vector.broadcast %14 : vector<1x256xf32> to vector<8x256xf32>
    %31 = arith.mulf %29, %30 : vector<8x256xf32>
    %32 = vector.extract_strided_slice %18 {offsets = [0, 1], sizes = [8, 1], strides = [1, 1]} : vector<8x9xf32> to vector<8x1xf32>
    %33 = vector.broadcast %32 : vector<8x1xf32> to vector<8x256xf32>
    %34 = arith.mulf %31, %33 : vector<8x256xf32>
    %35 = arith.addf %28, %34 : vector<8x256xf32>
    %c30_i32 = arith.constant 30 : i32
    %36 = tpu.dynamic_rotate %13 by %c30_i32 dim 1 : vector<8x256xf32>, i32 -> vector<8x256xf32>
    %37 = vector.broadcast %14 : vector<1x256xf32> to vector<8x256xf32>
    %38 = arith.mulf %36, %37 : vector<8x256xf32>
    %39 = vector.broadcast %17 : vector<1x256xf32> to vector<8x256xf32>
    %40 = arith.mulf %38, %39 : vector<8x256xf32>
    %41 = vector.extract_strided_slice %18 {offsets = [0, 2], sizes = [8, 1], strides = [1, 1]} : vector<8x9xf32> to vector<8x1xf32>
    %42 = vector.broadcast %41 : vector<8x1xf32> to vector<8x256xf32>
    %43 = arith.mulf %40, %42 : vector<8x256xf32>
    %44 = arith.addf %35, %43 : vector<8x256xf32>
    %c2_i32 = arith.constant 2 : i32
    %45 = tpu.dynamic_rotate %13 by %c2_i32 dim 1 : vector<8x256xf32>, i32 -> vector<8x256xf32>
    %46 = vector.broadcast %16 : vector<1x256xf32> to vector<8x256xf32>
    %47 = arith.mulf %45, %46 : vector<8x256xf32>
    %48 = vector.extract_strided_slice %18 {offsets = [0, 3], sizes = [8, 1], strides = [1, 1]} : vector<8x9xf32> to vector<8x1xf32>
    %49 = vector.broadcast %48 : vector<8x1xf32> to vector<8x256xf32>
    %50 = arith.mulf %47, %49 : vector<8x256xf32>
    %51 = arith.addf %44, %50 : vector<8x256xf32>
    %52 = vector.extract_strided_slice %18 {offsets = [0, 4], sizes = [8, 1], strides = [1, 1]} : vector<8x9xf32> to vector<8x1xf32>
    %53 = vector.broadcast %52 : vector<8x1xf32> to vector<8x256xf32>
    %54 = arith.mulf %13, %53 : vector<8x256xf32>
    %55 = arith.addf %51, %54 : vector<8x256xf32>
    %c254_i32 = arith.constant 254 : i32
    %56 = tpu.dynamic_rotate %13 by %c254_i32 dim 1 : vector<8x256xf32>, i32 -> vector<8x256xf32>
    %57 = vector.broadcast %17 : vector<1x256xf32> to vector<8x256xf32>
    %58 = arith.mulf %56, %57 : vector<8x256xf32>
    %59 = vector.extract_strided_slice %18 {offsets = [0, 5], sizes = [8, 1], strides = [1, 1]} : vector<8x9xf32> to vector<8x1xf32>
    %60 = vector.broadcast %59 : vector<8x1xf32> to vector<8x256xf32>
    %61 = arith.mulf %58, %60 : vector<8x256xf32>
    %62 = arith.addf %55, %61 : vector<8x256xf32>
    %c226_i32 = arith.constant 226 : i32
    %63 = tpu.dynamic_rotate %13 by %c226_i32 dim 1 : vector<8x256xf32>, i32 -> vector<8x256xf32>
    %64 = vector.broadcast %15 : vector<1x256xf32> to vector<8x256xf32>
    %65 = arith.mulf %63, %64 : vector<8x256xf32>
    %66 = vector.broadcast %16 : vector<1x256xf32> to vector<8x256xf32>
    %67 = arith.mulf %65, %66 : vector<8x256xf32>
    %68 = vector.extract_strided_slice %18 {offsets = [0, 6], sizes = [8, 1], strides = [1, 1]} : vector<8x9xf32> to vector<8x1xf32>
    %69 = vector.broadcast %68 : vector<8x1xf32> to vector<8x256xf32>
    %70 = arith.mulf %67, %69 : vector<8x256xf32>
    %71 = arith.addf %62, %70 : vector<8x256xf32>
    %c224_i32 = arith.constant 224 : i32
    %72 = tpu.dynamic_rotate %13 by %c224_i32 dim 1 : vector<8x256xf32>, i32 -> vector<8x256xf32>
    %73 = vector.broadcast %15 : vector<1x256xf32> to vector<8x256xf32>
    %74 = arith.mulf %72, %73 : vector<8x256xf32>
    %75 = vector.extract_strided_slice %18 {offsets = [0, 7], sizes = [8, 1], strides = [1, 1]} : vector<8x9xf32> to vector<8x1xf32>
    %76 = vector.broadcast %75 : vector<8x1xf32> to vector<8x256xf32>
    %77 = arith.mulf %74, %76 : vector<8x256xf32>
    %78 = arith.addf %71, %77 : vector<8x256xf32>
    %c222_i32 = arith.constant 222 : i32
    %79 = tpu.dynamic_rotate %13 by %c222_i32 dim 1 : vector<8x256xf32>, i32 -> vector<8x256xf32>
    %80 = vector.broadcast %15 : vector<1x256xf32> to vector<8x256xf32>
    %81 = arith.mulf %79, %80 : vector<8x256xf32>
    %82 = vector.broadcast %17 : vector<1x256xf32> to vector<8x256xf32>
    %83 = arith.mulf %81, %82 : vector<8x256xf32>
    %84 = vector.extract_strided_slice %18 {offsets = [0, 8], sizes = [8, 1], strides = [1, 1]} : vector<8x9xf32> to vector<8x1xf32>
    %85 = vector.broadcast %84 : vector<8x1xf32> to vector<8x256xf32>
    %86 = arith.mulf %83, %85 : vector<8x256xf32>
    %87 = arith.addf %78, %86 : vector<8x256xf32>
    %c0_14 = arith.constant 0 : index
    %c0_15 = arith.constant 0 : index
    %88 = vector.load %arg6[%c0_14, %c0_15] : memref<8x1xf32, #tpu.memory_space<vmem>>, vector<8x1xf32>
    %89 = vector.broadcast %88 : vector<8x1xf32> to vector<8x256xf32>
    %90 = arith.addf %87, %89 : vector<8x256xf32>
    %c0_16 = arith.constant 0 : index
    %c0_17 = arith.constant 0 : index
    %91 = vector.load %arg7[%c0_16, %c0_17] : memref<8x8xf32, #tpu.memory_space<vmem>>, vector<8x8xf32>
    %cst_18 = arith.constant 0.000000e+00 : f32
    %92 = vector.broadcast %cst_18 : f32 to vector<8x256xf32>
    %c0_19 = arith.constant 0 : index
    %c0_20 = arith.constant 0 : index
    %93 = vector.load %arg8[%c0_19, %c0_20] : memref<8x1xf32, #tpu.memory_space<vmem>>, vector<8x1xf32>
    %94 = vector.broadcast %93 : vector<8x1xf32> to vector<8x256xf32>
    %95 = arith.addf %92, %94 : vector<8x256xf32>
    %96 = vector.extract_strided_slice %90 {offsets = [0, 0], sizes = [1, 256], strides = [1, 1]} : vector<8x256xf32> to vector<1x256xf32>
    %97 = vector.extract_strided_slice %91 {offsets = [0, 0], sizes = [8, 1], strides = [1, 1]} : vector<8x8xf32> to vector<8x1xf32>
    %98 = vector.broadcast %96 : vector<1x256xf32> to vector<8x256xf32>
    %99 = vector.broadcast %97 : vector<8x1xf32> to vector<8x256xf32>
    %100 = arith.mulf %98, %99 : vector<8x256xf32>
    %101 = arith.addf %95, %100 : vector<8x256xf32>
    %102 = vector.extract_strided_slice %90 {offsets = [1, 0], sizes = [1, 256], strides = [1, 1]} : vector<8x256xf32> to vector<1x256xf32>
    %103 = vector.extract_strided_slice %91 {offsets = [0, 1], sizes = [8, 1], strides = [1, 1]} : vector<8x8xf32> to vector<8x1xf32>
    %104 = vector.broadcast %102 : vector<1x256xf32> to vector<8x256xf32>
    %105 = vector.broadcast %103 : vector<8x1xf32> to vector<8x256xf32>
    %106 = arith.mulf %104, %105 : vector<8x256xf32>
    %107 = arith.addf %101, %106 : vector<8x256xf32>
    %108 = vector.extract_strided_slice %90 {offsets = [2, 0], sizes = [1, 256], strides = [1, 1]} : vector<8x256xf32> to vector<1x256xf32>
    %109 = vector.extract_strided_slice %91 {offsets = [0, 2], sizes = [8, 1], strides = [1, 1]} : vector<8x8xf32> to vector<8x1xf32>
    %110 = vector.broadcast %108 : vector<1x256xf32> to vector<8x256xf32>
    %111 = vector.broadcast %109 : vector<8x1xf32> to vector<8x256xf32>
    %112 = arith.mulf %110, %111 : vector<8x256xf32>
    %113 = arith.addf %107, %112 : vector<8x256xf32>
    %114 = vector.extract_strided_slice %90 {offsets = [3, 0], sizes = [1, 256], strides = [1, 1]} : vector<8x256xf32> to vector<1x256xf32>
    %115 = vector.extract_strided_slice %91 {offsets = [0, 3], sizes = [8, 1], strides = [1, 1]} : vector<8x8xf32> to vector<8x1xf32>
    %116 = vector.broadcast %114 : vector<1x256xf32> to vector<8x256xf32>
    %117 = vector.broadcast %115 : vector<8x1xf32> to vector<8x256xf32>
    %118 = arith.mulf %116, %117 : vector<8x256xf32>
    %119 = arith.addf %113, %118 : vector<8x256xf32>
    %120 = vector.extract_strided_slice %90 {offsets = [4, 0], sizes = [1, 256], strides = [1, 1]} : vector<8x256xf32> to vector<1x256xf32>
    %121 = vector.extract_strided_slice %91 {offsets = [0, 4], sizes = [8, 1], strides = [1, 1]} : vector<8x8xf32> to vector<8x1xf32>
    %122 = vector.broadcast %120 : vector<1x256xf32> to vector<8x256xf32>
    %123 = vector.broadcast %121 : vector<8x1xf32> to vector<8x256xf32>
    %124 = arith.mulf %122, %123 : vector<8x256xf32>
    %125 = arith.addf %119, %124 : vector<8x256xf32>
    %126 = vector.extract_strided_slice %90 {offsets = [5, 0], sizes = [1, 256], strides = [1, 1]} : vector<8x256xf32> to vector<1x256xf32>
    %127 = vector.extract_strided_slice %91 {offsets = [0, 5], sizes = [8, 1], strides = [1, 1]} : vector<8x8xf32> to vector<8x1xf32>
    %128 = vector.broadcast %126 : vector<1x256xf32> to vector<8x256xf32>
    %129 = vector.broadcast %127 : vector<8x1xf32> to vector<8x256xf32>
    %130 = arith.mulf %128, %129 : vector<8x256xf32>
    %131 = arith.addf %125, %130 : vector<8x256xf32>
    %132 = vector.extract_strided_slice %90 {offsets = [6, 0], sizes = [1, 256], strides = [1, 1]} : vector<8x256xf32> to vector<1x256xf32>
    %133 = vector.extract_strided_slice %91 {offsets = [0, 6], sizes = [8, 1], strides = [1, 1]} : vector<8x8xf32> to vector<8x1xf32>
    %134 = vector.broadcast %132 : vector<1x256xf32> to vector<8x256xf32>
    %135 = vector.broadcast %133 : vector<8x1xf32> to vector<8x256xf32>
    %136 = arith.mulf %134, %135 : vector<8x256xf32>
    %137 = arith.addf %131, %136 : vector<8x256xf32>
    %138 = vector.extract_strided_slice %90 {offsets = [7, 0], sizes = [1, 256], strides = [1, 1]} : vector<8x256xf32> to vector<1x256xf32>
    %139 = vector.extract_strided_slice %91 {offsets = [0, 7], sizes = [8, 1], strides = [1, 1]} : vector<8x8xf32> to vector<8x1xf32>
    %140 = vector.broadcast %138 : vector<1x256xf32> to vector<8x256xf32>
    %141 = vector.broadcast %139 : vector<8x1xf32> to vector<8x256xf32>
    %142 = arith.mulf %140, %141 : vector<8x256xf32>
    %143 = arith.addf %137, %142 : vector<8x256xf32>
    %c0_21 = arith.constant 0 : index
    %c0_22 = arith.constant 0 : index
    %c0_23 = arith.constant 0 : index
    %144 = vector.load %arg9[%c0_21, %c0_22, %c0_23] : memref<1x8x256xf32, #tpu.memory_space<vmem>>, vector<1x8x256xf32>
    %145 = vector.shape_cast %144 : vector<1x8x256xf32> to vector<8x256xf32>
    %146 = vector.shape_cast %143 : vector<8x256xf32> to vector<1x8x256xf32>
    tpu.vector_store %arg9[%c0_21, %c0_22, %c0_23], %146 {strides = array<i32>} : memref<1x8x256xf32, #tpu.memory_space<vmem>>, vector<1x8x256xf32>,
    %cst_24 = arith.constant dense<0.000000e+00> : vector<8xf32>
    %147 = vector.multi_reduction <add>, %143, %cst_24 [1] : vector<8x256xf32> to vector<8xf32>
    %148 = vector.shape_cast %147 : vector<8xf32> to vector<8x1xf32>
    %c0_25 = arith.constant 0 : index
    %c0_26 = arith.constant 0 : index
    %c0_27 = arith.constant 0 : index
    %149 = vector.load %arg10[%c0_25, %c0_26, %c0_27] : memref<1x8x1xf32, #tpu.memory_space<vmem>>, vector<1x8x1xf32>
    %150 = vector.shape_cast %149 : vector<1x8x1xf32> to vector<8x1xf32>
    %151 = vector.shape_cast %148 : vector<8x1xf32> to vector<1x8x1xf32>
    tpu.vector_store %arg10[%c0_25, %c0_26, %c0_27], %151 {strides = array<i32>} : memref<1x8x1xf32, #tpu.memory_space<vmem>>, vector<1x8x1xf32>,
    %152 = arith.mulf %143, %143 : vector<8x256xf32>
    %cst_28 = arith.constant dense<0.000000e+00> : vector<8xf32>
    %153 = vector.multi_reduction <add>, %152, %cst_28 [1] : vector<8x256xf32> to vector<8xf32>
    %154 = vector.shape_cast %153 : vector<8xf32> to vector<8x1xf32>
    %c0_29 = arith.constant 0 : index
    %c0_30 = arith.constant 0 : index
    %c0_31 = arith.constant 0 : index
    %155 = vector.load %arg11[%c0_29, %c0_30, %c0_31] : memref<1x8x1xf32, #tpu.memory_space<vmem>>, vector<1x8x1xf32>
    %156 = vector.shape_cast %155 : vector<1x8x1xf32> to vector<8x1xf32>
    %157 = vector.shape_cast %154 : vector<8x1xf32> to vector<1x8x1xf32>
    tpu.vector_store %arg11[%c0_29, %c0_30, %c0_31], %157 {strides = array<i32>} : memref<1x8x1xf32, #tpu.memory_space<vmem>>, vector<1x8x1xf32>,
    return
  }
  func.func @transform_0(%arg0: i32) -> (i32, i32, i32) {
    %c0_i32 = arith.constant 0 : i32
    %c0_i32_0 = arith.constant 0 : i32
    %c0_i32_1 = arith.constant 0 : i32
    return %arg0, %c0_i32, %c0_i32_0 : i32, i32, i32
  }
  func.func @transform_1(%arg0: i32) -> (i32, i32) {
    %c0_i32 = arith.constant 0 : i32
    %c0_i32_0 = arith.constant 0 : i32
    %c0_i32_1 = arith.constant 0 : i32
    return %c0_i32, %c0_i32_0 : i32, i32
  }
  func.func @transform_2(%arg0: i32) -> (i32, i32) {
    %c0_i32 = arith.constant 0 : i32
    %c0_i32_0 = arith.constant 0 : i32
    %c0_i32_1 = arith.constant 0 : i32
    return %c0_i32, %c0_i32_0 : i32, i32
  }
  func.func @transform_3(%arg0: i32) -> (i32, i32) {
    %c0_i32 = arith.constant 0 : i32
    %c0_i32_0 = arith.constant 0 : i32
    %c0_i32_1 = arith.constant 0 : i32
    return %c0_i32, %c0_i32_0 : i32, i32
  }
  func.func @transform_4(%arg0: i32) -> (i32, i32) {
    %c0_i32 = arith.constant 0 : i32
    %c0_i32_0 = arith.constant 0 : i32
    %c0_i32_1 = arith.constant 0 : i32
    return %c0_i32, %c0_i32_0 : i32, i32
  }
  func.func @transform_5(%arg0: i32) -> (i32, i32) {
    %c0_i32 = arith.constant 0 : i32
    %c0_i32_0 = arith.constant 0 : i32
    %c0_i32_1 = arith.constant 0 : i32
    return %c0_i32, %c0_i32_0 : i32, i32
  }
  func.func @transform_6(%arg0: i32) -> (i32, i32) {
    %c0_i32 = arith.constant 0 : i32
    %c0_i32_0 = arith.constant 0 : i32
    %c0_i32_1 = arith.constant 0 : i32
    return %c0_i32, %c0_i32_0 : i32, i32
  }
  func.func @transform_7(%arg0: i32) -> (i32, i32) {
    %c0_i32 = arith.constant 0 : i32
    %c0_i32_0 = arith.constant 0 : i32
    %c0_i32_1 = arith.constant 0 : i32
    return %c0_i32, %c0_i32_0 : i32, i32
  }
  func.func @transform_8(%arg0: i32) -> (i32, i32, i32) {
    %c0_i32 = arith.constant 0 : i32
    %c0_i32_0 = arith.constant 0 : i32
    %c0_i32_1 = arith.constant 0 : i32
    return %arg0, %c0_i32, %c0_i32_0 : i32, i32, i32
  }
  func.func @transform_9(%arg0: i32) -> (i32, i32, i32) {
    %c0_i32 = arith.constant 0 : i32
    %c0_i32_0 = arith.constant 0 : i32
    %c0_i32_1 = arith.constant 0 : i32
    return %arg0, %c0_i32, %c0_i32_0 : i32, i32, i32
  }
  func.func @transform_10(%arg0: i32) -> (i32, i32, i32) {
    %c0_i32 = arith.constant 0 : i32
    %c0_i32_0 = arith.constant 0 : i32
    %c0_i32_1 = arith.constant 0 : i32
    return %arg0, %c0_i32, %c0_i32_0 : i32, i32, i32
  }
}

</mosaic_0001>

<llo_original>
// kernel: squeeze.6
$region0: #{squeeze.6}
  %s0 = inlined_call_operand.vmem [shape: f32[8,3,3], index: 0, kind: input, shape index: {}]
  %s1 = inlined_call_operand.vmem [shape: f32[8,9], index: 1, kind: output, shape index: {}]
  $region1: #{squeeze.6} parent=0
    #allocation0 [shape = 'u8[12288]{0}', space=vmem, size = 0x3000, scoped, tag = 'scoped mem for input reshape']
    %s3 = ssub.s32 16, 1
    %s4 = scalar_lea.vmem %s0, 8
    %v5 = vld [vmem:[%s4] sm:%s3]
    %s6 = scalar_lea.vmem [#allocation0], 16
    %7 = vst [vmem:[%s6] sm:%s3] %v5
    %s8 = scalar_lea.vmem %s0, 4
    %v9 = vld [vmem:[%s8] sm:%s3]
    %s10 = scalar_lea.vmem [#allocation0], 8
    %11 = vst [vmem:[%s10] sm:%s3] %v9
    %v12 = vld [vmem:[%s0] sm:%s3]
    %13 = vst [vmem:[#allocation0] sm:%s3] %v12
    %v14 = vld [vmem:[#allocation0] sm:$0x7]
    %vm15 = vcmask 64512
    %16 = vst.msk [vmem:[%s1] sm:$0x7] %vm15, %v14
    %s17 = scalar_lea.vmem [#allocation0], 8
    %v18 = vld [vmem:[%s17] sm:$0x7]
    %vm19 = vcmask 64512
    %s20 = scalar_lea.vmem %s1, 3
    %21 = vst.msk [vmem:[%s20] sm:$0x7] %vm19, %v18
    %s22 = scalar_lea.vmem [#allocation0], 16
    %v23 = vld [vmem:[%s22] sm:$0x7]
    %vm24 = vcmask 64512
    %s25 = scalar_lea.vmem %s1, 6
    %26 = vst.msk [vmem:[%s25] sm:$0x7] %vm24, %v23

// kernel: double_conv_dwsep_with_dilation.2
$region0: #{double_conv_dwsep_with_dilation.2}
  #allocation0 [shape = 'u32[]', space=smem, size = 0x4, offset = 0x4, fixed_abs, tag = 'smem constant byte address 0x4 - core index']
  #allocation1 [shape = 'u32[72,128]{1,0:T(1,128)}', space=vmem, size = 0x9000, scoped, tag = 'internal scratch']
  %s0 = inlined_call_operand.vmem [shape: f32[2,4,256], index: 0, kind: input, shape index: {}]
  %s1 = inlined_call_operand.vmem [shape: f32[4,256], index: 1, kind: input, shape index: {}]
  %s2 = inlined_call_operand.vmem [shape: f32[4,1], index: 2, kind: input, shape index: {}]
  %s3 = inlined_call_operand.vmem [shape: f32[4,1], index: 3, kind: input, shape index: {}]
  %s4 = inlined_call_operand.vmem [shape: f32[4,9], index: 4, kind: input, shape index: {}]
  %s5 = inlined_call_operand.vmem [shape: f32[4,1], index: 5, kind: input, shape index: {}]
  %s6 = inlined_call_operand.vmem [shape: f32[8,4], index: 6, kind: input, shape index: {}]
  %s7 = inlined_call_operand.vmem [shape: f32[8,1], index: 7, kind: input, shape index: {}]
  %s8 = inlined_call_operand.vmem [shape: f32[2,8,256], index: 8, kind: output, shape index: {0}]
  %s9 = inlined_call_operand.vmem [shape: f32[2,8,1], index: 9, kind: output, shape index: {1}]
  %s10 = inlined_call_operand.vmem [shape: f32[2,8,1], index: 10, kind: output, shape index: {2}]
  %11 = xla_tuple %s8, %s9, %s10
  %s12 = sld [smem:[#allocation0]]
  $region81: #{double_conv_dwsep_with_dilation.2} parent=0
    _
  %s14 = ssub.s32 1, %s12
  %s15 = scalar_select 0, %s14, %s12
  loop: start=0, step=1, limit=4
  $region2: #{double_conv_dwsep_with_dilation.2} parent=0 // loop_pre_header
    _
  $region3: #{double_conv_dwsep_with_dilation.2} parent=0 // loop_header
    %s17 = sphi 0, %s21
    %p18 = scmp.ge.s32.totalorder %s17, 4
    %s27 = sphi 0, %s29
    %s30 = sphi 0, %s27
    %s31 = sphi 0, %s30
    %s47 = sphi 0, %s31
    %s51 = sphi 0, %s51
    %s53 = sphi 0, %s51
    %s54 = sphi 0, %s53
    %s68 = sphi 0, %s54
    %s72 = sphi 0, %s72
    %s74 = sphi 0, %s72
    %s75 = sphi 0, %s74
    %s89 = sphi 0, %s75
    %s93 = sphi 0, %s93
    %s95 = sphi 0, %s93
    %s96 = sphi 0, %s95
    %s110 = sphi 0, %s96
    %s114 = sphi 0, %s114
    %s116 = sphi 0, %s114
    %s117 = sphi 0, %s116
    %s131 = sphi 0, %s117
    %s135 = sphi 0, %s135
    %s137 = sphi 0, %s135
    %s138 = sphi 0, %s137
    %s152 = sphi 0, %s138
    %s156 = sphi 0, %s156
    %s158 = sphi 0, %s156
    %s159 = sphi 0, %s158
    %s173 = sphi 0, %s159
    %s177 = sphi 0, %s177
    %s179 = sphi 0, %s177
    %s180 = sphi 0, %s179
    %s194 = sphi 0, %s180
    %s200 = sphi 0, %s202
    %s203 = sphi 0, %s200
    %s204 = sphi 0, %s203
    %s220 = sphi 0, %s204
    %s226 = sphi 0, %s228
    %s229 = sphi 0, %s226
    %s230 = sphi 0, %s229
    %s246 = sphi 0, %s230
    %s252 = sphi 0, %s254
    %s255 = sphi 0, %s252
    %s256 = sphi 0, %s255
    %s272 = sphi 0, %s256
  $region4: #{double_conv_dwsep_with_dilation.2} parent=0 // loop_header_branch
    %20 = sbr.rel (%p18) target = $region8
  $region5: #{double_conv_dwsep_with_dilation.2} parent=0 // loop_body
    %s22 = ssub.s32 %s17, 1
    %s23 = ssub.s32 %s17, 2
    %s24 = sadd.s32 %s17, 1
    %s25 = ssub.s32 %s17, %s24
    %p26 = scmp.eq.s32.totalorder %s25, 0
    %s28 = sadd.s32 %s27, 1
    %s29 = scalar_select %p26, %s27, %s28
    %p32 = pneg %p26
    %p33 = scmp.eq.s32.totalorder %s17, 1
    %p34 = por %p32, %p33
    %p35 = scmp.ne.s32.totalorder %s27, %s30
    %p36 = scmp.eq.s32.totalorder %s17, 0
    %p37 = por %p35, %p36
    %p38 = scmp.ne.s32.totalorder %s27, %s30
    %p39 = scmp.eq.s32.totalorder %s22, 1
    %p40 = por %p38, %p39
    %p41 = scmp.ne.s32.totalorder %s30, %s31
    %p42 = scmp.eq.s32.totalorder %s22, 0
    %p43 = por %p41, %p42
    %p44 = scmp.ne.s32.totalorder %s30, %s31
    %p45 = scmp.eq.s32.totalorder %s23, 1
    %p46 = por %p44, %p45
    %p48 = scmp.ne.s32.totalorder %s31, %s47
    %p49 = scmp.eq.s32.totalorder %s23, 0
    %p50 = por %p48, %p49
    %s52 = sadd.s32 %s51, 1
    %p55 = scmp.eq.s32.totalorder %s17, 1
    %p56 = scmp.ne.s32.totalorder %s51, %s53
    %p57 = scmp.eq.s32.totalorder %s17, 0
    %p58 = por %p56, %p57
    %p59 = scmp.ne.s32.totalorder %s51, %s53
    %p60 = scmp.eq.s32.totalorder %s22, 1
    %p61 = por %p59, %p60
    %p62 = scmp.ne.s32.totalorder %s53, %s54
    %p63 = scmp.eq.s32.totalorder %s22, 0
    %p64 = por %p62, %p63
    %p65 = scmp.ne.s32.totalorder %s53, %s54
    %p66 = scmp.eq.s32.totalorder %s23, 1
    %p67 = por %p65, %p66
    %p69 = scmp.ne.s32.totalorder %s54, %s68
    %p70 = scmp.eq.s32.totalorder %s23, 0
    %p71 = por %p69, %p70
    %s73 = sadd.s32 %s72, 1
    %p76 = scmp.eq.s32.totalorder %s17, 1
    %p77 = scmp.ne.s32.totalorder %s72, %s74
    %p78 = scmp.eq.s32.totalorder %s17, 0
    %p79 = por %p77, %p78
    %p80 = scmp.ne.s32.totalorder %s72, %s74
    %p81 = scmp.eq.s32.totalorder %s22, 1
    %p82 = por %p80, %p81
    %p83 = scmp.ne.s32.totalorder %s74, %s75
    %p84 = scmp.eq.s32.totalorder %s22, 0
    %p85 = por %p83, %p84
    %p86 = scmp.ne.s32.totalorder %s74, %s75
    %p87 = scmp.eq.s32.totalorder %s23, 1
    %p88 = por %p86, %p87
    %p90 = scmp.ne.s32.totalorder %s75, %s89
    %p91 = scmp.eq.s32.totalorder %s23, 0
    %p92 = por %p90, %p91
    %s94 = sadd.s32 %s93, 1
    %p97 = scmp.eq.s32.totalorder %s17, 1
    %p98 = scmp.ne.s32.totalorder %s93, %s95
    %p99 = scmp.eq.s32.totalorder %s17, 0
    %p100 = por %p98, %p99
    %p101 = scmp.ne.s32.totalorder %s93, %s95
    %p102 = scmp.eq.s32.totalorder %s22, 1
    %p103 = por %p101, %p102
    %p104 = scmp.ne.s32.totalorder %s95, %s96
    %p105 = scmp.eq.s32.totalorder %s22, 0
    %p106 = por %p104, %p105
    %p107 = scmp.ne.s32.totalorder %s95, %s96
    %p108 = scmp.eq.s32.totalorder %s23, 1
    %p109 = por %p107, %p108
    %p111 = scmp.ne.s32.totalorder %s96, %s110
    %p112 = scmp.eq.s32.totalorder %s23, 0
    %p113 = por %p111, %p112
    %s115 = sadd.s32 %s114, 1
    %p118 = scmp.eq.s32.totalorder %s17, 1
    %p119 = scmp.ne.s32.totalorder %s114, %s116
    %p120 = scmp.eq.s32.totalorder %s17, 0
    %p121 = por %p119, %p120
    %p122 = scmp.ne.s32.totalorder %s114, %s116
    %p123 = scmp.eq.s32.totalorder %s22, 1
    %p124 = por %p122, %p123
    %p125 = scmp.ne.s32.totalorder %s116, %s117
    %p126 = scmp.eq.s32.totalorder %s22, 0
    %p127 = por %p125, %p126
    %p128 = scmp.ne.s32.totalorder %s116, %s117
    %p129 = scmp.eq.s32.totalorder %s23, 1
    %p130 = por %p128, %p129
    %p132 = scmp.ne.s32.totalorder %s117, %s131
    %p133 = scmp.eq.s32.totalorder %s23, 0
    %p134 = por %p132, %p133
    %s136 = sadd.s32 %s135, 1
    %p139 = scmp.eq.s32.totalorder %s17, 1
    %p140 = scmp.ne.s32.totalorder %s135, %s137
    %p141 = scmp.eq.s32.totalorder %s17, 0
    %p142 = por %p140, %p141
    %p143 = scmp.ne.s32.totalorder %s135, %s137
    %p144 = scmp.eq.s32.totalorder %s22, 1
    %p145 = por %p143, %p144
    %p146 = scmp.ne.s32.totalorder %s137, %s138
    %p147 = scmp.eq.s32.totalorder %s22, 0
    %p148 = por %p146, %p147
    %p149 = scmp.ne.s32.totalorder %s137, %s138
    %p150 = scmp.eq.s32.totalorder %s23, 1
    %p151 = por %p149, %p150
    %p153 = scmp.ne.s32.totalorder %s138, %s152
    %p154 = scmp.eq.s32.totalorder %s23, 0
    %p155 = por %p153, %p154
    %s157 = sadd.s32 %s156, 1
    %p160 = scmp.eq.s32.totalorder %s17, 1
    %p161 = scmp.ne.s32.totalorder %s156, %s158
    %p162 = scmp.eq.s32.totalorder %s17, 0
    %p163 = por %p161, %p162
    %p164 = scmp.ne.s32.totalorder %s156, %s158
    %p165 = scmp.eq.s32.totalorder %s22, 1
    %p166 = por %p164, %p165
    %p167 = scmp.ne.s32.totalorder %s158, %s159
    %p168 = scmp.eq.s32.totalorder %s22, 0
    %p169 = por %p167, %p168
    %p170 = scmp.ne.s32.totalorder %s158, %s159
    %p171 = scmp.eq.s32.totalorder %s23, 1
    %p172 = por %p170, %p171
    %p174 = scmp.ne.s32.totalorder %s159, %s173
    %p175 = scmp.eq.s32.totalorder %s23, 0
    %p176 = por %p174, %p175
    %s178 = sadd.s32 %s177, 1
    %p181 = scmp.eq.s32.totalorder %s17, 1
    %p182 = scmp.ne.s32.totalorder %s177, %s179
    %p183 = scmp.eq.s32.totalorder %s17, 0
    %p184 = por %p182, %p183
    %p185 = scmp.ne.s32.totalorder %s177, %s179
    %p186 = scmp.eq.s32.totalorder %s22, 1
    %p187 = por %p185, %p186
    %p188 = scmp.ne.s32.totalorder %s179, %s180
    %p189 = scmp.eq.s32.totalorder %s22, 0
    %p190 = por %p188, %p189
    %p191 = scmp.ne.s32.totalorder %s179, %s180
    %p192 = scmp.eq.s32.totalorder %s23, 1
    %p193 = por %p191, %p192
    %p195 = scmp.ne.s32.totalorder %s180, %s194
    %p196 = scmp.eq.s32.totalorder %s23, 0
    %p197 = por %p195, %p196
    %s198 = ssub.s32 %s17, %s24
    %p199 = scmp.eq.s32.totalorder %s198, 0
    %s201 = sadd.s32 %s200, 1
    %s202 = scalar_select %p199, %s200, %s201
    %p205 = pneg %p199
    %p206 = scmp.eq.s32.totalorder %s17, 1
    %p207 = por %p205, %p206
    %p208 = scmp.ne.s32.totalorder %s200, %s203
    %p209 = scmp.eq.s32.totalorder %s17, 0
    %p210 = por %p208, %p209
    %p211 = scmp.ne.s32.totalorder %s200, %s203
    %p212 = scmp.eq.s32.totalorder %s22, 1
    %p213 = por %p211, %p212
    %p214 = scmp.ne.s32.totalorder %s203, %s204
    %p215 = scmp.eq.s32.totalorder %s22, 0
    %p216 = por %p214, %p215
    %p217 = scmp.ne.s32.totalorder %s203, %s204
    %p218 = scmp.eq.s32.totalorder %s23, 1
    %p219 = por %p217, %p218
    %p221 = scmp.ne.s32.totalorder %s204, %s220
    %p222 = scmp.eq.s32.totalorder %s23, 0
    %p223 = por %p221, %p222
    %s224 = ssub.s32 %s17, %s24
    %p225 = scmp.eq.s32.totalorder %s224, 0
    %s227 = sadd.s32 %s226, 1
    %s228 = scalar_select %p225, %s226, %s227
    %p231 = pneg %p225
    %p232 = scmp.eq.s32.totalorder %s17, 1
    %p233 = por %p231, %p232
    %p234 = scmp.ne.s32.totalorder %s226, %s229
    %p235 = scmp.eq.s32.totalorder %s17, 0
    %p236 = por %p234, %p235
    %p237 = scmp.ne.s32.totalorder %s226, %s229
    %p238 = scmp.eq.s32.totalorder %s22, 1
    %p239 = por %p237, %p238
    %p240 = scmp.ne.s32.totalorder %s229, %s230
    %p241 = scmp.eq.s32.totalorder %s22, 0
    %p242 = por %p240, %p241
    %p243 = scmp.ne.s32.totalorder %s229, %s230
    %p244 = scmp.eq.s32.totalorder %s23, 1
    %p245 = por %p243, %p244
    %p247 = scmp.ne.s32.totalorder %s230, %s246
    %p248 = scmp.eq.s32.totalorder %s23, 0
    %p249 = por %p247, %p248
    %s250 = ssub.s32 %s17, %s24
    %p251 = scmp.eq.s32.totalorder %s250, 0
    %s253 = sadd.s32 %s252, 1
    %s254 = scalar_select %p251, %s252, %s253
    %p257 = pneg %p251
    %p258 = scmp.eq.s32.totalorder %s17, 1
    %p259 = por %p257, %p258
    %p260 = scmp.ne.s32.totalorder %s252, %s255
    %p261 = scmp.eq.s32.totalorder %s17, 0
    %p262 = por %p260, %p261
    %p263 = scmp.ne.s32.totalorder %s252, %s255
    %p264 = scmp.eq.s32.totalorder %s22, 1
    %p265 = por %p263, %p264
    %p266 = scmp.ne.s32.totalorder %s255, %s256
    %p267 = scmp.eq.s32.totalorder %s22, 0
    %p268 = por %p266, %p267
    %p269 = scmp.ne.s32.totalorder %s255, %s256
    %p270 = scmp.eq.s32.totalorder %s23, 1
    %p271 = por %p269, %p270
    %p273 = scmp.ne.s32.totalorder %s256, %s272
    %p274 = scmp.eq.s32.totalorder %s23, 0
    %p275 = por %p273, %p274
    %p276 = scmp.le.s32.totalorder 1, %s17
    %p277 = scmp.lt.s32.totalorder %s17, 3
    %p278 = pnand %p276, %p277
    %p279 = pneg %p278
    // Predicated region
    $region9: #{double_conv_dwsep_with_dilation.2} parent=5 // pred_check
      _
    $region10: #{double_conv_dwsep_with_dilation.2} parent=5 // pred_check_branch
      %281 = sbr.rel (%p278) target = $region12
    $region11: #{double_conv_dwsep_with_dilation.2} parent=5 // pred_region
      %s282 = ssub.s32 %s17, 1
      // Predicated region
      $region13: #{double_conv_dwsep_with_dilation.2} parent=11 // pred_check
        %p283 = pneg %p64
      $region14: #{double_conv_dwsep_with_dilation.2} parent=11 // pred_check_branch
        %285 = sbr.rel (%p283) target = $region16
      $region15: #{double_conv_dwsep_with_dilation.2} parent=11 // pred_region
        _
      $region16: #{double_conv_dwsep_with_dilation.2} parent=11 // pred_fallthru
        _
      // Predicated region
      $region17: #{double_conv_dwsep_with_dilation.2} parent=11 // pred_check
        %p286 = pneg %p85
      $region18: #{double_conv_dwsep_with_dilation.2} parent=11 // pred_check_branch
        %288 = sbr.rel (%p286) target = $region20
      $region19: #{double_conv_dwsep_with_dilation.2} parent=11 // pred_region
        _
      $region20: #{double_conv_dwsep_with_dilation.2} parent=11 // pred_fallthru
        _
      // Predicated region
      $region21: #{double_conv_dwsep_with_dilation.2} parent=11 // pred_check
        %p289 = pneg %p106
      $region22: #{double_conv_dwsep_with_dilation.2} parent=11 // pred_check_branch
        %291 = sbr.rel (%p289) target = $region24
      $region23: #{double_conv_dwsep_with_dilation.2} parent=11 // pred_region
        _
      $region24: #{double_conv_dwsep_with_dilation.2} parent=11 // pred_fallthru
        _
      // Predicated region
      $region25: #{double_conv_dwsep_with_dilation.2} parent=11 // pred_check
        %p292 = pneg %p127
      $region26: #{double_conv_dwsep_with_dilation.2} parent=11 // pred_check_branch
        %294 = sbr.rel (%p292) target = $region28
      $region27: #{double_conv_dwsep_with_dilation.2} parent=11 // pred_region
        _
      $region28: #{double_conv_dwsep_with_dilation.2} parent=11 // pred_fallthru
        _
      // Predicated region
      $region29: #{double_conv_dwsep_with_dilation.2} parent=11 // pred_check
        %p295 = pneg %p148
      $region30: #{double_conv_dwsep_with_dilation.2} parent=11 // pred_check_branch
        %297 = sbr.rel (%p295) target = $region32
      $region31: #{double_conv_dwsep_with_dilation.2} parent=11 // pred_region
        _
      $region32: #{double_conv_dwsep_with_dilation.2} parent=11 // pred_fallthru
        _
      // Predicated region
      $region33: #{double_conv_dwsep_with_dilation.2} parent=11 // pred_check
        %p298 = pneg %p169
      $region34: #{double_conv_dwsep_with_dilation.2} parent=11 // pred_check_branch
        %300 = sbr.rel (%p298) target = $region36
      $region35: #{double_conv_dwsep_with_dilation.2} parent=11 // pred_region
        _
      $region36: #{double_conv_dwsep_with_dilation.2} parent=11 // pred_fallthru
        _
      // Predicated region
      $region37: #{double_conv_dwsep_with_dilation.2} parent=11 // pred_check
        %p301 = pneg %p190
      $region38: #{double_conv_dwsep_with_dilation.2} parent=11 // pred_check_branch
        %303 = sbr.rel (%p301) target = $region40
      $region39: #{double_conv_dwsep_with_dilation.2} parent=11 // pred_region
        _
      $region40: #{double_conv_dwsep_with_dilation.2} parent=11 // pred_fallthru
        _
    $region12: #{double_conv_dwsep_with_dilation.2} parent=5 // pred_fallthru
      _
    %p304 = scmp.lt.s32.totalorder %s17, 2
    // Predicated region
    $region41: #{double_conv_dwsep_with_dilation.2} parent=5 // pred_check
      %p305 = pneg %p304
    $region42: #{double_conv_dwsep_with_dilation.2} parent=5 // pred_check_branch
      %307 = sbr.rel (%p305) target = $region44
    $region43: #{double_conv_dwsep_with_dilation.2} parent=5 // pred_region
      // Predicated region
      $region45: #{double_conv_dwsep_with_dilation.2} parent=43 // pred_check
        %p308 = pneg %p37
      $region46: #{double_conv_dwsep_with_dilation.2} parent=43 // pred_check_branch
        %310 = sbr.rel (%p308) target = $region48
      $region47: #{double_conv_dwsep_with_dilation.2} parent=43 // pred_region
        %p311 = scmp.lt.s32.totalorder %s17, 1
        %s312 = scalar_select %p311, %s17, 1
        %s313 = smul.addr %s312, 2
        %s314 = smul.addr %s313, 4
        %s315 = scalar_lea.vmem %s0, %s314
      $region48: #{double_conv_dwsep_with_dilation.2} parent=43 // pred_fallthru
        _
    $region44: #{double_conv_dwsep_with_dilation.2} parent=5 // pred_fallthru
      _
    %p316 = scmp.le.s32.totalorder 1, %s17
    %p317 = scmp.lt.s32.totalorder %s17, 3
    %p318 = pnand %p316, %p317
    %p319 = pneg %p318
    // Predicated region
    $region49: #{double_conv_dwsep_with_dilation.2} parent=5 // pred_check
      _
    $region50: #{double_conv_dwsep_with_dilation.2} parent=5 // pred_check_branch
      %321 = sbr.rel (%p318) target = $region52
    $region51: #{double_conv_dwsep_with_dilation.2} parent=5 // pred_region
      %s322 = ssub.s32 %s17, 1
      %p323 = scmp.lt.s32.totalorder %s22, 1
      %s324 = scalar_select %p323, %s22, 1
      %s325 = smul.addr %s324, 2
      %s326 = smul.addr %s325, 4
      %s327 = scalar_lea.vmem %s0, %s326
      %p328 = pneg %p43
      %p329 = pneg %p40
      %p330 = pneg %p64
      %p331 = pneg %p61
      %p332 = pneg %p85
      %p333 = pneg %p82
      %p334 = pneg %p106
      %p335 = pneg %p103
      %p336 = pneg %p127
      %p337 = pneg %p124
      %p338 = pneg %p148
      %p339 = pneg %p145
      %p340 = pneg %p169
      %p341 = pneg %p166
      %p342 = pneg %p190
      %p343 = pneg %p187
      %p344 = pneg %p216
      %p345 = pneg %p213
      %p346 = scmp.lt.s32.totalorder %s22, 1
      %s347 = scalar_select %p346, %s22, 1
      %s348 = smul.addr %s347, 2
      %s349 = smul.addr %s348, 8
      %s350 = scalar_lea.vmem %s8, %s349
      %p351 = pneg %p242
      %p352 = pneg %p239
      %p353 = scmp.lt.s32.totalorder %s22, 1
      %s354 = scalar_select %p353, %s22, 1
      %s355 = smul.addr %s354, 8
      %s356 = scalar_lea.vmem %s9, %s355
      %p357 = pneg %p268
      %p358 = pneg %p265
      %p359 = scmp.lt.s32.totalorder %s22, 1
      %s360 = scalar_select %p359, %s22, 1
      %s361 = smul.addr %s360, 8
      %s362 = scalar_lea.vmem %s10, %s361
      %p363 = scmp.lt.s32.totalorder %s22, 1
      %s364 = scalar_select %p363, %s22, 1
      %s365 = smul.addr %s364, 2
      %s366 = smul.addr %s365, 4
      %s367 = scalar_lea.vmem %s0, %s366
      %p368 = scmp.lt.s32.totalorder %s22, 1
      %s369 = scalar_select %p368, %s22, 1
      %s370 = smul.addr %s369, 2
      %s371 = smul.addr %s370, 8
      %s372 = scalar_lea.vmem %s8, %s371
      %p373 = scmp.lt.s32.totalorder %s22, 1
      %s374 = scalar_select %p373, %s22, 1
      %s375 = smul.addr %s374, 8
      %s376 = scalar_lea.vmem %s9, %s375
      %p377 = scmp.lt.s32.totalorder %s22, 1
      %s378 = scalar_select %p377, %s22, 1
      %s379 = smul.addr %s378, 8
      %s380 = scalar_lea.vmem %s10, %s379
      %v381 = vld [vmem:[%s367] sm:$0xff]
      %v382 = vld [vmem:[%s1] ss:$4 sm:$0x3]
      %s383 = scalar_lea.vmem %s1, 1
      %v384 = vld [vmem:[%s383] ss:$4 sm:$0x3]
      %s385 = scalar_lea.vmem %s1, 2
      %v386 = vld [vmem:[%s385] ss:$4 sm:$0x3]
      %s387 = scalar_lea.vmem %s1, 3
      %v388 = vld [vmem:[%s387] ss:$4 sm:$0x3]
      %v389 = vld [vmem:[%s4] sm:$0xf]
      %391 = vst [vmem:[#allocation1] ss:$2 sm:$0xff] %v381
      %v392 = vld.sshfl [vmem:[#allocation1] sm:$0xff pattern:$0x75316420]
      %v393 = vld.sshfl [vmem:[#allocation1 + $0x8] sm:$0xff pattern:$0x75316420]
      %396 = vrot.lane.b32.xlu0 %v392, 34
      %v397 = vpop.permute.xlu0 %396
      %398 = vrot.lane.b32.xlu0 %v393, 34
      %v399 = vpop.permute.xlu0 %398
      %v400 = vlaneseq
      %v401 = vand.u32 %v400, 127
      %vm402 = vcmp.lt.s32.totalorder %v401, 34
      %v403 = vsel %vm402, %v397, %v399
      %v404 = vsel %vm402, %v399, %v397
      %v406 = vperm.slane %v382, 0
      %v407 = vperm.slane %v382, 1
      %v410 = vmul.f32 %v404, %v406
      %v411 = vmul.f32 %v403, %v407
      %v413 = vperm.slane %v386, 0
      %v414 = vperm.slane %v386, 1
      %v417 = vmul.f32 %v410, %v413
      %v418 = vmul.f32 %v411, %v414
      %420 = vset.pattern.permute.xlu0 0
      %421 = vperm.xlu0 %420, %v389
      %v422 = vpop.permute.xlu0 %421
      %v424 = vmul.f32 %v417, %v422
      %v425 = vmul.f32 %v418, %v422
      %v426 = vadd.f32 %v424, 0.0
      %v427 = vadd.f32 %v425, 0.0
      %428 = vst [vmem:[#allocation1] ss:$2 sm:$0xff] %v381
      %v429 = vld.sshfl [vmem:[#allocation1] sm:$0xff pattern:$0x75316420]
      %v430 = vld.sshfl [vmem:[#allocation1 + $0x8] sm:$0xff pattern:$0x75316420]
      %433 = vrot.lane.b32.xlu0 %v429, 32
      %v434 = vpop.permute.xlu0 %433
      %435 = vrot.lane.b32.xlu0 %v430, 32
      %v436 = vpop.permute.xlu0 %435
      %vm437 = vcmp.lt.s32.totalorder %v401, 32
      %v438 = vsel %vm437, %v434, %v436
      %v439 = vsel %vm437, %v436, %v434
      %v440 = vmul.f32 %v439, %v406
      %v441 = vmul.f32 %v438, %v407
      %442 = vset.pattern.permute.xlu0 1
      %443 = vperm.xlu0 %442, %v389
      %v444 = vpop.permute.xlu0 %443
      %v446 = vmul.f32 %v440, %v444
      %v447 = vmul.f32 %v441, %v444
      %v448 = vadd.f32 %v426, %v446
      %v449 = vadd.f32 %v427, %v447
      %450 = vst [vmem:[#allocation1] ss:$2 sm:$0xff] %v381
      %v451 = vld.sshfl [vmem:[#allocation1] sm:$0xff pattern:$0x75316420]
      %v452 = vld.sshfl [vmem:[#allocation1 + $0x8] sm:$0xff pattern:$0x75316420]
      %455 = vrot.lane.b32.xlu0 %v451, 30
      %v456 = vpop.permute.xlu0 %455
      %457 = vrot.lane.b32.xlu0 %v452, 30
      %v458 = vpop.permute.xlu0 %457
      %vm459 = vcmp.lt.s32.totalorder %v401, 30
      %v460 = vsel %vm459, %v456, %v458
      %v461 = vsel %vm459, %v458, %v456
      %v462 = vmul.f32 %v461, %v406
      %v463 = vmul.f32 %v460, %v407
      %v465 = vperm.slane %v388, 0
      %v466 = vperm.slane %v388, 1
      %v469 = vmul.f32 %v462, %v465
      %v470 = vmul.f32 %v463, %v466
      %471 = vset.pattern.permute.xlu0 2
      %472 = vperm.xlu0 %471, %v389
      %v473 = vpop.permute.xlu0 %472
      %v475 = vmul.f32 %v469, %v473
      %v476 = vmul.f32 %v470, %v473
      %v477 = vadd.f32 %v448, %v475
      %v478 = vadd.f32 %v449, %v476
      %479 = vst [vmem:[#allocation1] ss:$2 sm:$0xff] %v381
      %v480 = vld.sshfl [vmem:[#allocation1] sm:$0xff pattern:$0x75316420]
      %v481 = vld.sshfl [vmem:[#allocation1 + $0x8] sm:$0xff pattern:$0x75316420]
      %484 = vrot.lane.b32.xlu0 %v480, 2
      %v485 = vpop.permute.xlu0 %484
      %486 = vrot.lane.b32.xlu0 %v481, 2
      %v487 = vpop.permute.xlu0 %486
      %vm488 = vcmp.lt.s32.totalorder %v401, 2
      %v489 = vsel %vm488, %v485, %v487
      %v490 = vsel %vm488, %v487, %v485
      %v491 = vmul.f32 %v490, %v413
      %v492 = vmul.f32 %v489, %v414
      %493 = vset.pattern.permute.xlu0 3
      %494 = vperm.xlu0 %493, %v389
      %v495 = vpop.permute.xlu0 %494
      %v497 = vmul.f32 %v491, %v495
      %v498 = vmul.f32 %v492, %v495
      %v499 = vadd.f32 %v477, %v497
      %v500 = vadd.f32 %v478, %v498
      %501 = vset.pattern.permute.xlu0 4
      %502 = vperm.xlu0 %501, %v389
      %v503 = vpop.permute.xlu0 %502
      %v505 = vunpack.c.l.s4 839922192
      %v506 = vunpack.c.0.s8 %v505
      %v507 = vperm.slane %v503, %v506
      %v509 = vmul.f32 %v381, %v507
      %511 = vst [vmem:[#allocation1] ss:$2 sm:$0xff] %v509
      %v512 = vld.sshfl [vmem:[#allocation1] sm:$0xff pattern:$0x75316420]
      %v513 = vld.sshfl [vmem:[#allocation1 + $0x8] sm:$0xff pattern:$0x75316420]
      %v516 = vadd.f32 %v499, %v512
      %v517 = vadd.f32 %v500, %v513
      %518 = vst [vmem:[#allocation1] ss:$2 sm:$0xff] %v381
      %v519 = vld.sshfl [vmem:[#allocation1] sm:$0xff pattern:$0x75316420]
      %v520 = vld.sshfl [vmem:[#allocation1 + $0x8] sm:$0xff pattern:$0x75316420]
      %523 = vrot.lane.b32.xlu0 %v519, 126
      %v524 = vpop.permute.xlu0 %523
      %525 = vrot.lane.b32.xlu0 %v520, 126
      %v526 = vpop.permute.xlu0 %525
      %vm527 = vcmp.lt.s32.totalorder %v401, 126
      %v528 = vsel %vm527, %v524, %v526
      %v529 = vsel %vm527, %v526, %v524
      %v530 = vmul.f32 %v528, %v465
      %v531 = vmul.f32 %v529, %v466
      %532 = vset.pattern.permute.xlu0 5
      %533 = vperm.xlu0 %532, %v389
      %v534 = vpop.permute.xlu0 %533
      %v536 = vmul.f32 %v530, %v534
      %v537 = vmul.f32 %v531, %v534
      %v538 = vadd.f32 %v516, %v536
      %v539 = vadd.f32 %v517, %v537
      %540 = vst [vmem:[#allocation1] ss:$2 sm:$0xff] %v381
      %v541 = vld.sshfl [vmem:[#allocation1] sm:$0xff pattern:$0x75316420]
      %v542 = vld.sshfl [vmem:[#allocation1 + $0x8] sm:$0xff pattern:$0x75316420]
      %545 = vrot.lane.b32.xlu0 %v541, 98
      %v546 = vpop.permute.xlu0 %545
      %547 = vrot.lane.b32.xlu0 %v542, 98
      %v548 = vpop.permute.xlu0 %547
      %vm549 = vcmp.lt.s32.totalorder %v401, 98
      %v550 = vsel %vm549, %v546, %v548
      %v551 = vsel %vm549, %v548, %v546
      %v553 = vperm.slane %v384, 0
      %v554 = vperm.slane %v384, 1
      %v557 = vmul.f32 %v550, %v553
      %v558 = vmul.f32 %v551, %v554
      %v559 = vmul.f32 %v557, %v413
      %v560 = vmul.f32 %v558, %v414
      %561 = vset.pattern.permute.xlu0 6
      %562 = vperm.xlu0 %561, %v389
      %v563 = vpop.permute.xlu0 %562
      %v565 = vmul.f32 %v559, %v563
      %v566 = vmul.f32 %v560, %v563
      %v567 = vadd.f32 %v538, %v565
      %v568 = vadd.f32 %v539, %v566
      %569 = vst [vmem:[#allocation1] ss:$2 sm:$0xff] %v381
      %v570 = vld.sshfl [vmem:[#allocation1] sm:$0xff pattern:$0x75316420]
      %v571 = vld.sshfl [vmem:[#allocation1 + $0x8] sm:$0xff pattern:$0x75316420]
      %574 = vrot.lane.b32.xlu0 %v570, 96
      %v575 = vpop.permute.xlu0 %574
      %576 = vrot.lane.b32.xlu0 %v571, 96
      %v577 = vpop.permute.xlu0 %576
      %vm578 = vcmp.lt.s32.totalorder %v401, 96
      %v579 = vsel %vm578, %v575, %v577
      %v580 = vsel %vm578, %v577, %v575
      %v581 = vmul.f32 %v579, %v553
      %v582 = vmul.f32 %v580, %v554
      %583 = vset.pattern.permute.xlu0 7
      %584 = vperm.xlu0 %583, %v389
      %v585 = vpop.permute.xlu0 %584
      %v587 = vmul.f32 %v581, %v585
      %v588 = vmul.f32 %v582, %v585
      %v589 = vadd.f32 %v567, %v587
      %v590 = vadd.f32 %v568, %v588
      %591 = vst [vmem:[#allocation1] ss:$2 sm:$0xff] %v381
      %v592 = vld.sshfl [vmem:[#allocation1] sm:$0xff pattern:$0x75316420]
      %v593 = vld.sshfl [vmem:[#allocation1 + $0x8] sm:$0xff pattern:$0x75316420]
      %596 = vrot.lane.b32.xlu0 %v592, 94
      %v597 = vpop.permute.xlu0 %596
      %598 = vrot.lane.b32.xlu0 %v593, 94
      %v599 = vpop.permute.xlu0 %598
      %vm600 = vcmp.lt.s32.totalorder %v401, 94
      %v601 = vsel %vm600, %v597, %v599
      %v602 = vsel %vm600, %v599, %v597
      %v603 = vmul.f32 %v601, %v553
      %v604 = vmul.f32 %v602, %v554
      %v605 = vmul.f32 %v603, %v465
      %v606 = vmul.f32 %v604, %v466
      %607 = vset.pattern.permute.xlu0 8
      %608 = vperm.xlu0 %607, %v389
      %v609 = vpop.permute.xlu0 %608
      %v611 = vmul.f32 %v605, %v609
      %v612 = vmul.f32 %v606, %v609
      %v613 = vadd.f32 %v589, %v611
      %v614 = vadd.f32 %v590, %v612
      %v615 = vld [vmem:[%s5] sm:$0xf]
      %617 = vset.pattern.permute.xlu0 0
      %618 = vperm.xlu0 %617, %v615
      %v619 = vpop.permute.xlu0 %618
      %v621 = vadd.f32 %v613, %v619
      %v622 = vadd.f32 %v614, %v619
      %v623 = vld [vmem:[%s6] sm:$0xff]
      %v624 = vld [vmem:[%s7] sm:$0xff]
      %626 = vset.pattern.permute.xlu0 0
      %627 = vperm.xlu0 %626, %v624
      %v628 = vpop.permute.xlu0 %627
      %v630 = vadd.f32 %v628, 0.0
      %v631 = vperm.slane %v621, 0
      %v632 = vperm.slane %v622, 0
      %634 = vset.pattern.permute.xlu0 0
      %635 = vperm.xlu0 %634, %v623
      %v636 = vpop.permute.xlu0 %635
      %v638 = vmul.f32 %v631, %v636
      %v639 = vmul.f32 %v632, %v636
      %v640 = vadd.f32 %v630, %v638
      %v641 = vadd.f32 %v630, %v639
      %v642 = vperm.slane %v621, 1
      %v643 = vperm.slane %v622, 1
      %644 = vset.pattern.permute.xlu0 1
      %645 = vperm.xlu0 %644, %v623
      %v646 = vpop.permute.xlu0 %645
      %v648 = vmul.f32 %v642, %v646
      %v649 = vmul.f32 %v643, %v646
      %v650 = vadd.f32 %v640, %v648
      %v651 = vadd.f32 %v641, %v649
      %v652 = vperm.slane %v621, 2
      %v653 = vperm.slane %v622, 2
      %654 = vset.pattern.permute.xlu0 2
      %655 = vperm.xlu0 %654, %v623
      %v656 = vpop.permute.xlu0 %655
      %v658 = vmul.f32 %v652, %v656
      %v659 = vmul.f32 %v653, %v656
      %v660 = vadd.f32 %v650, %v658
      %v661 = vadd.f32 %v651, %v659
      %v662 = vperm.slane %v621, 3
      %v663 = vperm.slane %v622, 3
      %664 = vset.pattern.permute.xlu0 3
      %665 = vperm.xlu0 %664, %v623
      %v666 = vpop.permute.xlu0 %665
      %v668 = vmul.f32 %v662, %v666
      %v669 = vmul.f32 %v663, %v666
      %v670 = vadd.f32 %v660, %v668
      %v671 = vadd.f32 %v661, %v669
      %672 = vst [vmem:[%s372] sm:$0xff] %v670
      %673 = vst [vmem:[%s372 + $0x8] sm:$0xff] %v671
      %v674 = vadd.f32 %v670, %v671
      %675 = vadd.xlane.f32.xlu0 %v674
      %v676 = vpop.xlane.xlu0 %675
      %vm677 = vcmask 7168
      %678 = vst.msk [vmem:[%s376] sm:$0xff] %vm677, %v676
      %v679 = vmul.f32 %v670, %v670
      %v680 = vmul.f32 %v671, %v671
      %v681 = vadd.f32 %v679, %v680
      %682 = vadd.xlane.f32.xlu0 %v681
      %v683 = vpop.xlane.xlu0 %682
      %684 = vst.msk [vmem:[%s380] sm:$0xff] %vm677, %v683
      %p685 = scmp.lt.s32.totalorder %s22, 1
      %s686 = scalar_select %p685, %s22, 1
      %s687 = smul.addr %s686, 2
      %s688 = smul.addr %s687, 8
      %s689 = scalar_lea.vmem %s8, %s688
      %p690 = scmp.lt.s32.totalorder %s22, 1
      %s691 = scalar_select %p690, %s22, 1
      %s692 = smul.addr %s691, 8
      %s693 = scalar_lea.vmem %s9, %s692
      %p694 = scmp.lt.s32.totalorder %s22, 1
      %s695 = scalar_select %p694, %s22, 1
      %s696 = smul.addr %s695, 8
      %s697 = scalar_lea.vmem %s10, %s696
      // Predicated region
      $region53: #{double_conv_dwsep_with_dilation.2} parent=51 // pred_check
        %p698 = pneg %p213
      $region54: #{double_conv_dwsep_with_dilation.2} parent=51 // pred_check_branch
        %700 = sbr.rel (%p698) target = $region56
      $region55: #{double_conv_dwsep_with_dilation.2} parent=51 // pred_region
        _
      $region56: #{double_conv_dwsep_with_dilation.2} parent=51 // pred_fallthru
        _
      // Predicated region
      $region57: #{double_conv_dwsep_with_dilation.2} parent=51 // pred_check
        %p701 = pneg %p239
      $region58: #{double_conv_dwsep_with_dilation.2} parent=51 // pred_check_branch
        %703 = sbr.rel (%p701) target = $region60
      $region59: #{double_conv_dwsep_with_dilation.2} parent=51 // pred_region
        _
      $region60: #{double_conv_dwsep_with_dilation.2} parent=51 // pred_fallthru
        _
      // Predicated region
      $region61: #{double_conv_dwsep_with_dilation.2} parent=51 // pred_check
        %p704 = pneg %p265
      $region62: #{double_conv_dwsep_with_dilation.2} parent=51 // pred_check_branch
        %706 = sbr.rel (%p704) target = $region64
      $region63: #{double_conv_dwsep_with_dilation.2} parent=51 // pred_region
        _
      $region64: #{double_conv_dwsep_with_dilation.2} parent=51 // pred_fallthru
        _
    $region52: #{double_conv_dwsep_with_dilation.2} parent=5 // pred_fallthru
      _
    %p707 = scmp.le.s32.totalorder 2, %s17
    // Predicated region
    $region65: #{double_conv_dwsep_with_dilation.2} parent=5 // pred_check
      %p708 = pneg %p707
    $region66: #{double_conv_dwsep_with_dilation.2} parent=5 // pred_check_branch
      %710 = sbr.rel (%p708) target = $region68
    $region67: #{double_conv_dwsep_with_dilation.2} parent=5 // pred_region
      %s711 = ssub.s32 %s17, 2
      // Predicated region
      $region69: #{double_conv_dwsep_with_dilation.2} parent=67 // pred_check
        %p712 = pneg %p219
      $region70: #{double_conv_dwsep_with_dilation.2} parent=67 // pred_check_branch
        %714 = sbr.rel (%p712) target = $region72
      $region71: #{double_conv_dwsep_with_dilation.2} parent=67 // pred_region
        %p715 = scmp.lt.s32.totalorder %s23, 1
        %s716 = scalar_select %p715, %s23, 1
        %s717 = smul.addr %s716, 2
        %s718 = smul.addr %s717, 8
        %s719 = scalar_lea.vmem %s8, %s718
      $region72: #{double_conv_dwsep_with_dilation.2} parent=67 // pred_fallthru
        _
      // Predicated region
      $region73: #{double_conv_dwsep_with_dilation.2} parent=67 // pred_check
        %p720 = pneg %p245
      $region74: #{double_conv_dwsep_with_dilation.2} parent=67 // pred_check_branch
        %722 = sbr.rel (%p720) target = $region76
      $region75: #{double_conv_dwsep_with_dilation.2} parent=67 // pred_region
        %p723 = scmp.lt.s32.totalorder %s23, 1
        %s724 = scalar_select %p723, %s23, 1
        %s725 = smul.addr %s724, 8
        %s726 = scalar_lea.vmem %s9, %s725
      $region76: #{double_conv_dwsep_with_dilation.2} parent=67 // pred_fallthru
        _
      // Predicated region
      $region77: #{double_conv_dwsep_with_dilation.2} parent=67 // pred_check
        %p727 = pneg %p271
      $region78: #{double_conv_dwsep_with_dilation.2} parent=67 // pred_check_branch
        %729 = sbr.rel (%p727) target = $region80
      $region79: #{double_conv_dwsep_with_dilation.2} parent=67 // pred_region
        %p730 = scmp.lt.s32.totalorder %s23, 1
        %s731 = scalar_select %p730, %s23, 1
        %s732 = smul.addr %s731, 8
        %s733 = scalar_lea.vmem %s10, %s732
      $region80: #{double_conv_dwsep_with_dilation.2} parent=67 // pred_fallthru
        _
    $region68: #{double_conv_dwsep_with_dilation.2} parent=5 // pred_fallthru
      _
  $region6: #{double_conv_dwsep_with_dilation.2} parent=0 // loop_footer
    %s21 = sadd.s32 1, %s17
  $region7: #{double_conv_dwsep_with_dilation.2} parent=0 // loop_footer_branch
    %16 = sbr.rel target = $region3
  $region8: #{double_conv_dwsep_with_dilation.2} parent=0 // loop_exit
    _

// kernel: double_conv_dwsep_with_dilation.3
$region0: #{double_conv_dwsep_with_dilation.3}
  #allocation0 [shape = 'u32[]', space=smem, size = 0x4, offset = 0x4, fixed_abs, tag = 'smem constant byte address 0x4 - core index']
  #allocation1 [shape = 'u32[72,128]{1,0:T(1,128)}', space=vmem, size = 0x9000, scoped, tag = 'internal scratch']
  %s0 = inlined_call_operand.vmem [shape: f32[2,8,256], index: 0, kind: input, shape index: {}]
  %s1 = inlined_call_operand.vmem [shape: f32[4,256], index: 1, kind: input, shape index: {}]
  %s2 = inlined_call_operand.vmem [shape: f32[8,1], index: 2, kind: input, shape index: {}]
  %s3 = inlined_call_operand.vmem [shape: f32[8,1], index: 3, kind: input, shape index: {}]
  %s4 = inlined_call_operand.vmem [shape: f32[8,9], index: 4, kind: input, shape index: {}]
  %s5 = inlined_call_operand.vmem [shape: f32[8,1], index: 5, kind: input, shape index: {}]
  %s6 = inlined_call_operand.vmem [shape: f32[8,8], index: 6, kind: input, shape index: {}]
  %s7 = inlined_call_operand.vmem [shape: f32[8,1], index: 7, kind: input, shape index: {}]
  %s8 = inlined_call_operand.vmem [shape: f32[2,8,256], index: 8, kind: output, shape index: {0}]
  %s9 = inlined_call_operand.vmem [shape: f32[2,8,1], index: 9, kind: output, shape index: {1}]
  %s10 = inlined_call_operand.vmem [shape: f32[2,8,1], index: 10, kind: output, shape index: {2}]
  %11 = xla_tuple %s8, %s9, %s10
  %s12 = sld [smem:[#allocation0]]
  $region81: #{double_conv_dwsep_with_dilation.3} parent=0
    _
  %s14 = ssub.s32 1, %s12
  %s15 = scalar_select 0, %s14, %s12
  loop: start=0, step=1, limit=4
  $region2: #{double_conv_dwsep_with_dilation.3} parent=0 // loop_pre_header
    _
  $region3: #{double_conv_dwsep_with_dilation.3} parent=0 // loop_header
    %s17 = sphi 0, %s21
    %p18 = scmp.ge.s32.totalorder %s17, 4
    %s27 = sphi 0, %s29
    %s30 = sphi 0, %s27
    %s31 = sphi 0, %s30
    %s47 = sphi 0, %s31
    %s51 = sphi 0, %s51
    %s53 = sphi 0, %s51
    %s54 = sphi 0, %s53
    %s68 = sphi 0, %s54
    %s72 = sphi 0, %s72
    %s74 = sphi 0, %s72
    %s75 = sphi 0, %s74
    %s89 = sphi 0, %s75
    %s93 = sphi 0, %s93
    %s95 = sphi 0, %s93
    %s96 = sphi 0, %s95
    %s110 = sphi 0, %s96
    %s114 = sphi 0, %s114
    %s116 = sphi 0, %s114
    %s117 = sphi 0, %s116
    %s131 = sphi 0, %s117
    %s135 = sphi 0, %s135
    %s137 = sphi 0, %s135
    %s138 = sphi 0, %s137
    %s152 = sphi 0, %s138
    %s156 = sphi 0, %s156
    %s158 = sphi 0, %s156
    %s159 = sphi 0, %s158
    %s173 = sphi 0, %s159
    %s177 = sphi 0, %s177
    %s179 = sphi 0, %s177
    %s180 = sphi 0, %s179
    %s194 = sphi 0, %s180
    %s200 = sphi 0, %s202
    %s203 = sphi 0, %s200
    %s204 = sphi 0, %s203
    %s220 = sphi 0, %s204
    %s226 = sphi 0, %s228
    %s229 = sphi 0, %s226
    %s230 = sphi 0, %s229
    %s246 = sphi 0, %s230
    %s252 = sphi 0, %s254
    %s255 = sphi 0, %s252
    %s256 = sphi 0, %s255
    %s272 = sphi 0, %s256
  $region4: #{double_conv_dwsep_with_dilation.3} parent=0 // loop_header_branch
    %20 = sbr.rel (%p18) target = $region8
  $region5: #{double_conv_dwsep_with_dilation.3} parent=0 // loop_body
    %s22 = ssub.s32 %s17, 1
    %s23 = ssub.s32 %s17, 2
    %s24 = sadd.s32 %s17, 1
    %s25 = ssub.s32 %s17, %s24
    %p26 = scmp.eq.s32.totalorder %s25, 0
    %s28 = sadd.s32 %s27, 1
    %s29 = scalar_select %p26, %s27, %s28
    %p32 = pneg %p26
    %p33 = scmp.eq.s32.totalorder %s17, 1
    %p34 = por %p32, %p33
    %p35 = scmp.ne.s32.totalorder %s27, %s30
    %p36 = scmp.eq.s32.totalorder %s17, 0
    %p37 = por %p35, %p36
    %p38 = scmp.ne.s32.totalorder %s27, %s30
    %p39 = scmp.eq.s32.totalorder %s22, 1
    %p40 = por %p38, %p39
    %p41 = scmp.ne.s32.totalorder %s30, %s31
    %p42 = scmp.eq.s32.totalorder %s22, 0
    %p43 = por %p41, %p42
    %p44 = scmp.ne.s32.totalorder %s30, %s31
    %p45 = scmp.eq.s32.totalorder %s23, 1
    %p46 = por %p44, %p45
    %p48 = scmp.ne.s32.totalorder %s31, %s47
    %p49 = scmp.eq.s32.totalorder %s23, 0
    %p50 = por %p48, %p49
    %s52 = sadd.s32 %s51, 1
    %p55 = scmp.eq.s32.totalorder %s17, 1
    %p56 = scmp.ne.s32.totalorder %s51, %s53
    %p57 = scmp.eq.s32.totalorder %s17, 0
    %p58 = por %p56, %p57
    %p59 = scmp.ne.s32.totalorder %s51, %s53
    %p60 = scmp.eq.s32.totalorder %s22, 1
    %p61 = por %p59, %p60
    %p62 = scmp.ne.s32.totalorder %s53, %s54
    %p63 = scmp.eq.s32.totalorder %s22, 0
    %p64 = por %p62, %p63
    %p65 = scmp.ne.s32.totalorder %s53, %s54
    %p66 = scmp.eq.s32.totalorder %s23, 1
    %p67 = por %p65, %p66
    %p69 = scmp.ne.s32.totalorder %s54, %s68
    %p70 = scmp.eq.s32.totalorder %s23, 0
    %p71 = por %p69, %p70
    %s73 = sadd.s32 %s72, 1
    %p76 = scmp.eq.s32.totalorder %s17, 1
    %p77 = scmp.ne.s32.totalorder %s72, %s74
    %p78 = scmp.eq.s32.totalorder %s17, 0
    %p79 = por %p77, %p78
    %p80 = scmp.ne.s32.totalorder %s72, %s74
    %p81 = scmp.eq.s32.totalorder %s22, 1
    %p82 = por %p80, %p81
    %p83 = scmp.ne.s32.totalorder %s74, %s75
    %p84 = scmp.eq.s32.totalorder %s22, 0
    %p85 = por %p83, %p84
    %p86 = scmp.ne.s32.totalorder %s74, %s75
    %p87 = scmp.eq.s32.totalorder %s23, 1
    %p88 = por %p86, %p87
    %p90 = scmp.ne.s32.totalorder %s75, %s89
    %p91 = scmp.eq.s32.totalorder %s23, 0
    %p92 = por %p90, %p91
    %s94 = sadd.s32 %s93, 1
    %p97 = scmp.eq.s32.totalorder %s17, 1
    %p98 = scmp.ne.s32.totalorder %s93, %s95
    %p99 = scmp.eq.s32.totalorder %s17, 0
    %p100 = por %p98, %p99
    %p101 = scmp.ne.s32.totalorder %s93, %s95
    %p102 = scmp.eq.s32.totalorder %s22, 1
    %p103 = por %p101, %p102
    %p104 = scmp.ne.s32.totalorder %s95, %s96
    %p105 = scmp.eq.s32.totalorder %s22, 0
    %p106 = por %p104, %p105
    %p107 = scmp.ne.s32.totalorder %s95, %s96
    %p108 = scmp.eq.s32.totalorder %s23, 1
    %p109 = por %p107, %p108
    %p111 = scmp.ne.s32.totalorder %s96, %s110
    %p112 = scmp.eq.s32.totalorder %s23, 0
    %p113 = por %p111, %p112
    %s115 = sadd.s32 %s114, 1
    %p118 = scmp.eq.s32.totalorder %s17, 1
    %p119 = scmp.ne.s32.totalorder %s114, %s116
    %p120 = scmp.eq.s32.totalorder %s17, 0
    %p121 = por %p119, %p120
    %p122 = scmp.ne.s32.totalorder %s114, %s116
    %p123 = scmp.eq.s32.totalorder %s22, 1
    %p124 = por %p122, %p123
    %p125 = scmp.ne.s32.totalorder %s116, %s117
    %p126 = scmp.eq.s32.totalorder %s22, 0
    %p127 = por %p125, %p126
    %p128 = scmp.ne.s32.totalorder %s116, %s117
    %p129 = scmp.eq.s32.totalorder %s23, 1
    %p130 = por %p128, %p129
    %p132 = scmp.ne.s32.totalorder %s117, %s131
    %p133 = scmp.eq.s32.totalorder %s23, 0
    %p134 = por %p132, %p133
    %s136 = sadd.s32 %s135, 1
    %p139 = scmp.eq.s32.totalorder %s17, 1
    %p140 = scmp.ne.s32.totalorder %s135, %s137
    %p141 = scmp.eq.s32.totalorder %s17, 0
    %p142 = por %p140, %p141
    %p143 = scmp.ne.s32.totalorder %s135, %s137
    %p144 = scmp.eq.s32.totalorder %s22, 1
    %p145 = por %p143, %p144
    %p146 = scmp.ne.s32.totalorder %s137, %s138
    %p147 = scmp.eq.s32.totalorder %s22, 0
    %p148 = por %p146, %p147
    %p149 = scmp.ne.s32.totalorder %s137, %s138
    %p150 = scmp.eq.s32.totalorder %s23, 1
    %p151 = por %p149, %p150
    %p153 = scmp.ne.s32.totalorder %s138, %s152
    %p154 = scmp.eq.s32.totalorder %s23, 0
    %p155 = por %p153, %p154
    %s157 = sadd.s32 %s156, 1
    %p160 = scmp.eq.s32.totalorder %s17, 1
    %p161 = scmp.ne.s32.totalorder %s156, %s158
    %p162 = scmp.eq.s32.totalorder %s17, 0
    %p163 = por %p161, %p162
    %p164 = scmp.ne.s32.totalorder %s156, %s158
    %p165 = scmp.eq.s32.totalorder %s22, 1
    %p166 = por %p164, %p165
    %p167 = scmp.ne.s32.totalorder %s158, %s159
    %p168 = scmp.eq.s32.totalorder %s22, 0
    %p169 = por %p167, %p168
    %p170 = scmp.ne.s32.totalorder %s158, %s159
    %p171 = scmp.eq.s32.totalorder %s23, 1
    %p172 = por %p170, %p171
    %p174 = scmp.ne.s32.totalorder %s159, %s173
    %p175 = scmp.eq.s32.totalorder %s23, 0
    %p176 = por %p174, %p175
    %s178 = sadd.s32 %s177, 1
    %p181 = scmp.eq.s32.totalorder %s17, 1
    %p182 = scmp.ne.s32.totalorder %s177, %s179
    %p183 = scmp.eq.s32.totalorder %s17, 0
    %p184 = por %p182, %p183
    %p185 = scmp.ne.s32.totalorder %s177, %s179
    %p186 = scmp.eq.s32.totalorder %s22, 1
    %p187 = por %p185, %p186
    %p188 = scmp.ne.s32.totalorder %s179, %s180
    %p189 = scmp.eq.s32.totalorder %s22, 0
    %p190 = por %p188, %p189
    %p191 = scmp.ne.s32.totalorder %s179, %s180
    %p192 = scmp.eq.s32.totalorder %s23, 1
    %p193 = por %p191, %p192
    %p195 = scmp.ne.s32.totalorder %s180, %s194
    %p196 = scmp.eq.s32.totalorder %s23, 0
    %p197 = por %p195, %p196
    %s198 = ssub.s32 %s17, %s24
    %p199 = scmp.eq.s32.totalorder %s198, 0
    %s201 = sadd.s32 %s200, 1
    %s202 = scalar_select %p199, %s200, %s201
    %p205 = pneg %p199
    %p206 = scmp.eq.s32.totalorder %s17, 1
    %p207 = por %p205, %p206
    %p208 = scmp.ne.s32.totalorder %s200, %s203
    %p209 = scmp.eq.s32.totalorder %s17, 0
    %p210 = por %p208, %p209
    %p211 = scmp.ne.s32.totalorder %s200, %s203
    %p212 = scmp.eq.s32.totalorder %s22, 1
    %p213 = por %p211, %p212
    %p214 = scmp.ne.s32.totalorder %s203, %s204
    %p215 = scmp.eq.s32.totalorder %s22, 0
    %p216 = por %p214, %p215
    %p217 = scmp.ne.s32.totalorder %s203, %s204
    %p218 = scmp.eq.s32.totalorder %s23, 1
    %p219 = por %p217, %p218
    %p221 = scmp.ne.s32.totalorder %s204, %s220
    %p222 = scmp.eq.s32.totalorder %s23, 0
    %p223 = por %p221, %p222
    %s224 = ssub.s32 %s17, %s24
    %p225 = scmp.eq.s32.totalorder %s224, 0
    %s227 = sadd.s32 %s226, 1
    %s228 = scalar_select %p225, %s226, %s227
    %p231 = pneg %p225
    %p232 = scmp.eq.s32.totalorder %s17, 1
    %p233 = por %p231, %p232
    %p234 = scmp.ne.s32.totalorder %s226, %s229
    %p235 = scmp.eq.s32.totalorder %s17, 0
    %p236 = por %p234, %p235
    %p237 = scmp.ne.s32.totalorder %s226, %s229
    %p238 = scmp.eq.s32.totalorder %s22, 1
    %p239 = por %p237, %p238
    %p240 = scmp.ne.s32.totalorder %s229, %s230
    %p241 = scmp.eq.s32.totalorder %s22, 0
    %p242 = por %p240, %p241
    %p243 = scmp.ne.s32.totalorder %s229, %s230
    %p244 = scmp.eq.s32.totalorder %s23, 1
    %p245 = por %p243, %p244
    %p247 = scmp.ne.s32.totalorder %s230, %s246
    %p248 = scmp.eq.s32.totalorder %s23, 0
    %p249 = por %p247, %p248
    %s250 = ssub.s32 %s17, %s24
    %p251 = scmp.eq.s32.totalorder %s250, 0
    %s253 = sadd.s32 %s252, 1
    %s254 = scalar_select %p251, %s252, %s253
    %p257 = pneg %p251
    %p258 = scmp.eq.s32.totalorder %s17, 1
    %p259 = por %p257, %p258
    %p260 = scmp.ne.s32.totalorder %s252, %s255
    %p261 = scmp.eq.s32.totalorder %s17, 0
    %p262 = por %p260, %p261
    %p263 = scmp.ne.s32.totalorder %s252, %s255
    %p264 = scmp.eq.s32.totalorder %s22, 1
    %p265 = por %p263, %p264
    %p266 = scmp.ne.s32.totalorder %s255, %s256
    %p267 = scmp.eq.s32.totalorder %s22, 0
    %p268 = por %p266, %p267
    %p269 = scmp.ne.s32.totalorder %s255, %s256
    %p270 = scmp.eq.s32.totalorder %s23, 1
    %p271 = por %p269, %p270
    %p273 = scmp.ne.s32.totalorder %s256, %s272
    %p274 = scmp.eq.s32.totalorder %s23, 0
    %p275 = por %p273, %p274
    %p276 = scmp.le.s32.totalorder 1, %s17
    %p277 = scmp.lt.s32.totalorder %s17, 3
    %p278 = pnand %p276, %p277
    %p279 = pneg %p278
    // Predicated region
    $region9: #{double_conv_dwsep_with_dilation.3} parent=5 // pred_check
      _
    $region10: #{double_conv_dwsep_with_dilation.3} parent=5 // pred_check_branch
      %281 = sbr.rel (%p278) target = $region12
    $region11: #{double_conv_dwsep_with_dilation.3} parent=5 // pred_region
      %s282 = ssub.s32 %s17, 1
      // Predicated region
      $region13: #{double_conv_dwsep_with_dilation.3} parent=11 // pred_check
        %p283 = pneg %p64
      $region14: #{double_conv_dwsep_with_dilation.3} parent=11 // pred_check_branch
        %285 = sbr.rel (%p283) target = $region16
      $region15: #{double_conv_dwsep_with_dilation.3} parent=11 // pred_region
        _
      $region16: #{double_conv_dwsep_with_dilation.3} parent=11 // pred_fallthru
        _
      // Predicated region
      $region17: #{double_conv_dwsep_with_dilation.3} parent=11 // pred_check
        %p286 = pneg %p85
      $region18: #{double_conv_dwsep_with_dilation.3} parent=11 // pred_check_branch
        %288 = sbr.rel (%p286) target = $region20
      $region19: #{double_conv_dwsep_with_dilation.3} parent=11 // pred_region
        _
      $region20: #{double_conv_dwsep_with_dilation.3} parent=11 // pred_fallthru
        _
      // Predicated region
      $region21: #{double_conv_dwsep_with_dilation.3} parent=11 // pred_check
        %p289 = pneg %p106
      $region22: #{double_conv_dwsep_with_dilation.3} parent=11 // pred_check_branch
        %291 = sbr.rel (%p289) target = $region24
      $region23: #{double_conv_dwsep_with_dilation.3} parent=11 // pred_region
        _
      $region24: #{double_conv_dwsep_with_dilation.3} parent=11 // pred_fallthru
        _
      // Predicated region
      $region25: #{double_conv_dwsep_with_dilation.3} parent=11 // pred_check
        %p292 = pneg %p127
      $region26: #{double_conv_dwsep_with_dilation.3} parent=11 // pred_check_branch
        %294 = sbr.rel (%p292) target = $region28
      $region27: #{double_conv_dwsep_with_dilation.3} parent=11 // pred_region
        _
      $region28: #{double_conv_dwsep_with_dilation.3} parent=11 // pred_fallthru
        _
      // Predicated region
      $region29: #{double_conv_dwsep_with_dilation.3} parent=11 // pred_check
        %p295 = pneg %p148
      $region30: #{double_conv_dwsep_with_dilation.3} parent=11 // pred_check_branch
        %297 = sbr.rel (%p295) target = $region32
      $region31: #{double_conv_dwsep_with_dilation.3} parent=11 // pred_region
        _
      $region32: #{double_conv_dwsep_with_dilation.3} parent=11 // pred_fallthru
        _
      // Predicated region
      $region33: #{double_conv_dwsep_with_dilation.3} parent=11 // pred_check
        %p298 = pneg %p169
      $region34: #{double_conv_dwsep_with_dilation.3} parent=11 // pred_check_branch
        %300 = sbr.rel (%p298) target = $region36
      $region35: #{double_conv_dwsep_with_dilation.3} parent=11 // pred_region
        _
      $region36: #{double_conv_dwsep_with_dilation.3} parent=11 // pred_fallthru
        _
      // Predicated region
      $region37: #{double_conv_dwsep_with_dilation.3} parent=11 // pred_check
        %p301 = pneg %p190
      $region38: #{double_conv_dwsep_with_dilation.3} parent=11 // pred_check_branch
        %303 = sbr.rel (%p301) target = $region40
      $region39: #{double_conv_dwsep_with_dilation.3} parent=11 // pred_region
        _
      $region40: #{double_conv_dwsep_with_dilation.3} parent=11 // pred_fallthru
        _
    $region12: #{double_conv_dwsep_with_dilation.3} parent=5 // pred_fallthru
      _
    %p304 = scmp.lt.s32.totalorder %s17, 2
    // Predicated region
    $region41: #{double_conv_dwsep_with_dilation.3} parent=5 // pred_check
      %p305 = pneg %p304
    $region42: #{double_conv_dwsep_with_dilation.3} parent=5 // pred_check_branch
      %307 = sbr.rel (%p305) target = $region44
    $region43: #{double_conv_dwsep_with_dilation.3} parent=5 // pred_region
      // Predicated region
      $region45: #{double_conv_dwsep_with_dilation.3} parent=43 // pred_check
        %p308 = pneg %p37
      $region46: #{double_conv_dwsep_with_dilation.3} parent=43 // pred_check_branch
        %310 = sbr.rel (%p308) target = $region48
      $region47: #{double_conv_dwsep_with_dilation.3} parent=43 // pred_region
        %p311 = scmp.lt.s32.totalorder %s17, 1
        %s312 = scalar_select %p311, %s17, 1
        %s313 = smul.addr %s312, 2
        %s314 = smul.addr %s313, 8
        %s315 = scalar_lea.vmem %s0, %s314
      $region48: #{double_conv_dwsep_with_dilation.3} parent=43 // pred_fallthru
        _
    $region44: #{double_conv_dwsep_with_dilation.3} parent=5 // pred_fallthru
      _
    %p316 = scmp.le.s32.totalorder 1, %s17
    %p317 = scmp.lt.s32.totalorder %s17, 3
    %p318 = pnand %p316, %p317
    %p319 = pneg %p318
    // Predicated region
    $region49: #{double_conv_dwsep_with_dilation.3} parent=5 // pred_check
      _
    $region50: #{double_conv_dwsep_with_dilation.3} parent=5 // pred_check_branch
      %321 = sbr.rel (%p318) target = $region52
    $region51: #{double_conv_dwsep_with_dilation.3} parent=5 // pred_region
      %s322 = ssub.s32 %s17, 1
      %p323 = scmp.lt.s32.totalorder %s22, 1
      %s324 = scalar_select %p323, %s22, 1
      %s325 = smul.addr %s324, 2
      %s326 = smul.addr %s325, 8
      %s327 = scalar_lea.vmem %s0, %s326
      %p328 = pneg %p43
      %p329 = pneg %p40
      %p330 = pneg %p64
      %p331 = pneg %p61
      %p332 = pneg %p85
      %p333 = pneg %p82
      %p334 = pneg %p106
      %p335 = pneg %p103
      %p336 = pneg %p127
      %p337 = pneg %p124
      %p338 = pneg %p148
      %p339 = pneg %p145
      %p340 = pneg %p169
      %p341 = pneg %p166
      %p342 = pneg %p190
      %p343 = pneg %p187
      %p344 = pneg %p216
      %p345 = pneg %p213
      %p346 = scmp.lt.s32.totalorder %s22, 1
      %s347 = scalar_select %p346, %s22, 1
      %s348 = smul.addr %s347, 2
      %s349 = smul.addr %s348, 8
      %s350 = scalar_lea.vmem %s8, %s349
      %p351 = pneg %p242
      %p352 = pneg %p239
      %p353 = scmp.lt.s32.totalorder %s22, 1
      %s354 = scalar_select %p353, %s22, 1
      %s355 = smul.addr %s354, 8
      %s356 = scalar_lea.vmem %s9, %s355
      %p357 = pneg %p268
      %p358 = pneg %p265
      %p359 = scmp.lt.s32.totalorder %s22, 1
      %s360 = scalar_select %p359, %s22, 1
      %s361 = smul.addr %s360, 8
      %s362 = scalar_lea.vmem %s10, %s361
      %p363 = scmp.lt.s32.totalorder %s22, 1
      %s364 = scalar_select %p363, %s22, 1
      %s365 = smul.addr %s364, 2
      %s366 = smul.addr %s365, 8
      %s367 = scalar_lea.vmem %s0, %s366
      %p368 = scmp.lt.s32.totalorder %s22, 1
      %s369 = scalar_select %p368, %s22, 1
      %s370 = smul.addr %s369, 2
      %s371 = smul.addr %s370, 8
      %s372 = scalar_lea.vmem %s8, %s371
      %p373 = scmp.lt.s32.totalorder %s22, 1
      %s374 = scalar_select %p373, %s22, 1
      %s375 = smul.addr %s374, 8
      %s376 = scalar_lea.vmem %s9, %s375
      %p377 = scmp.lt.s32.totalorder %s22, 1
      %s378 = scalar_select %p377, %s22, 1
      %s379 = smul.addr %s378, 8
      %s380 = scalar_lea.vmem %s10, %s379
      %v381 = vld [vmem:[%s367] sm:$0xff]
      %v382 = vld [vmem:[%s367 + $0x8] sm:$0xff]
      %v383 = vld [vmem:[%s2] sm:$0xff]
      %385 = vset.pattern.permute.xlu0 0
      %386 = vperm.xlu0 %385, %v383
      %v387 = vpop.permute.xlu0 %386
      %v389 = vmul.f32 %v381, %v387
      %v390 = vmul.f32 %v382, %v387
      %v391 = vld [vmem:[%s3] sm:$0xff]
      %393 = vset.pattern.permute.xlu0 0
      %394 = vperm.xlu0 %393, %v391
      %v395 = vpop.permute.xlu0 %394
      %v397 = vadd.f32 %v389, %v395
      %v398 = vadd.f32 %v390, %v395
      %v399 = vxor.u32 %v397, 2147483648
      %v400 = vxor.u32 %v398, 2147483648
      %v401 = vmul.f32 %v399, 1.442695
      %v402 = vpow.pop %v401
      %v403 = vmul.f32 %v400, 1.442695
      %v404 = vpow.pop %v403
      %v405 = vadd.f32 %v402, 1.0
      %v406 = vadd.f32 %v404, 1.0
      %v407 = vrcp.pop %v405
      %v408 = vmul.f32 %v405, %v407
      %v409 = vsub.f32 1.0, %v408
      %v410 = vmul.f32 %v407, %v409
      %v411 = vadd.f32 %v407, %v410
      %vm412 = vweird.f32 %v405
      %vm413 = vweird.f32 %v407
      %vm414 = vmor %vm412, %vm413
      %v415 = vsel %vm414, %v407, %v411
      %v416 = vand.u32 2147483647, %v405
      %vm417 = vcmp.eq.f32.partialorder %v416, 8.507059e+37
      %v418 = vand.u32 %v405, 2147483648
      %v419 = vor.u32 1.1754944e-38, %v418
      %v420 = vsel %vm417, %v419, %v415
      %v421 = vmul.f32 1.0, %v420
      %v422 = vrcp.pop %v406
      %v423 = vmul.f32 %v406, %v422
      %v424 = vsub.f32 1.0, %v423
      %v425 = vmul.f32 %v422, %v424
      %v426 = vadd.f32 %v422, %v425
      %vm427 = vweird.f32 %v406
      %vm428 = vweird.f32 %v422
      %vm429 = vmor %vm427, %vm428
      %v430 = vsel %vm429, %v422, %v426
      %v431 = vand.u32 2147483647, %v406
      %vm432 = vcmp.eq.f32.partialorder %v431, 8.507059e+37
      %v433 = vand.u32 %v406, 2147483648
      %v434 = vor.u32 1.1754944e-38, %v433
      %v435 = vsel %vm432, %v434, %v430
      %v436 = vmul.f32 1.0, %v435
      %v437 = vmul.f32 %v397, %v421
      %v438 = vmul.f32 %v398, %v436
      %v439 = vld [vmem:[%s1] ss:$4 sm:$0x3]
      %s440 = scalar_lea.vmem %s1, 1
      %v441 = vld [vmem:[%s440] ss:$4 sm:$0x3]
      %s442 = scalar_lea.vmem %s1, 2
      %v443 = vld [vmem:[%s442] ss:$4 sm:$0x3]
      %s444 = scalar_lea.vmem %s1, 3
      %v445 = vld [vmem:[%s444] ss:$4 sm:$0x3]
      %v446 = vld [vmem:[%s4] sm:$0xff]
      %447 = vrot.lane.b32.xlu0 %v437, 34
      %v448 = vpop.permute.xlu0 %447
      %449 = vrot.lane.b32.xlu0 %v438, 34
      %v450 = vpop.permute.xlu0 %449
      %v451 = vlaneseq
      %v452 = vand.u32 %v451, 127
      %vm453 = vcmp.lt.s32.totalorder %v452, 34
      %v454 = vsel %vm453, %v448, %v450
      %v455 = vsel %vm453, %v450, %v448
      %v457 = vperm.slane %v439, 0
      %v458 = vperm.slane %v439, 1
      %v461 = vmul.f32 %v455, %v457
      %v462 = vmul.f32 %v454, %v458
      %v464 = vperm.slane %v443, 0
      %v465 = vperm.slane %v443, 1
      %v468 = vmul.f32 %v461, %v464
      %v469 = vmul.f32 %v462, %v465
      %471 = vset.pattern.permute.xlu0 0
      %472 = vperm.xlu0 %471, %v446
      %v473 = vpop.permute.xlu0 %472
      %v475 = vmul.f32 %v468, %v473
      %v476 = vmul.f32 %v469, %v473
      %v477 = vadd.f32 %v475, 0.0
      %v478 = vadd.f32 %v476, 0.0
      %479 = vrot.lane.b32.xlu0 %v437, 32
      %v480 = vpop.permute.xlu0 %479
      %481 = vrot.lane.b32.xlu0 %v438, 32
      %v482 = vpop.permute.xlu0 %481
      %vm483 = vcmp.lt.s32.totalorder %v452, 32
      %v484 = vsel %vm483, %v480, %v482
      %v485 = vsel %vm483, %v482, %v480
      %v486 = vmul.f32 %v485, %v457
      %v487 = vmul.f32 %v484, %v458
      %488 = vset.pattern.permute.xlu0 1
      %489 = vperm.xlu0 %488, %v446
      %v490 = vpop.permute.xlu0 %489
      %v492 = vmul.f32 %v486, %v490
      %v493 = vmul.f32 %v487, %v490
      %v494 = vadd.f32 %v477, %v492
      %v495 = vadd.f32 %v478, %v493
      %496 = vrot.lane.b32.xlu0 %v437, 30
      %v497 = vpop.permute.xlu0 %496
      %498 = vrot.lane.b32.xlu0 %v438, 30
      %v499 = vpop.permute.xlu0 %498
      %vm500 = vcmp.lt.s32.totalorder %v452, 30
      %v501 = vsel %vm500, %v497, %v499
      %v502 = vsel %vm500, %v499, %v497
      %v503 = vmul.f32 %v502, %v457
      %v504 = vmul.f32 %v501, %v458
      %v506 = vperm.slane %v445, 0
      %v507 = vperm.slane %v445, 1
      %v510 = vmul.f32 %v503, %v506
      %v511 = vmul.f32 %v504, %v507
      %512 = vset.pattern.permute.xlu0 2
      %513 = vperm.xlu0 %512, %v446
      %v514 = vpop.permute.xlu0 %513
      %v516 = vmul.f32 %v510, %v514
      %v517 = vmul.f32 %v511, %v514
      %v518 = vadd.f32 %v494, %v516
      %v519 = vadd.f32 %v495, %v517
      %520 = vrot.lane.b32.xlu0 %v437, 2
      %v521 = vpop.permute.xlu0 %520
      %522 = vrot.lane.b32.xlu0 %v438, 2
      %v523 = vpop.permute.xlu0 %522
      %vm524 = vcmp.lt.s32.totalorder %v452, 2
      %v525 = vsel %vm524, %v521, %v523
      %v526 = vsel %vm524, %v523, %v521
      %v527 = vmul.f32 %v526, %v464
      %v528 = vmul.f32 %v525, %v465
      %529 = vset.pattern.permute.xlu0 3
      %530 = vperm.xlu0 %529, %v446
      %v531 = vpop.permute.xlu0 %530
      %v533 = vmul.f32 %v527, %v531
      %v534 = vmul.f32 %v528, %v531
      %v535 = vadd.f32 %v518, %v533
      %v536 = vadd.f32 %v519, %v534
      %537 = vset.pattern.permute.xlu0 4
      %538 = vperm.xlu0 %537, %v446
      %v539 = vpop.permute.xlu0 %538
      %v541 = vmul.f32 %v437, %v539
      %v542 = vmul.f32 %v438, %v539
      %v543 = vadd.f32 %v535, %v541
      %v544 = vadd.f32 %v536, %v542
      %545 = vrot.lane.b32.xlu0 %v437, 126
      %v546 = vpop.permute.xlu0 %545
      %547 = vrot.lane.b32.xlu0 %v438, 126
      %v548 = vpop.permute.xlu0 %547
      %vm549 = vcmp.lt.s32.totalorder %v452, 126
      %v550 = vsel %vm549, %v546, %v548
      %v551 = vsel %vm549, %v548, %v546
      %v552 = vmul.f32 %v550, %v506
      %v553 = vmul.f32 %v551, %v507
      %554 = vset.pattern.permute.xlu0 5
      %555 = vperm.xlu0 %554, %v446
      %v556 = vpop.permute.xlu0 %555
      %v558 = vmul.f32 %v552, %v556
      %v559 = vmul.f32 %v553, %v556
      %v560 = vadd.f32 %v543, %v558
      %v561 = vadd.f32 %v544, %v559
      %562 = vrot.lane.b32.xlu0 %v437, 98
      %v563 = vpop.permute.xlu0 %562
      %564 = vrot.lane.b32.xlu0 %v438, 98
      %v565 = vpop.permute.xlu0 %564
      %vm566 = vcmp.lt.s32.totalorder %v452, 98
      %v567 = vsel %vm566, %v563, %v565
      %v568 = vsel %vm566, %v565, %v563
      %v570 = vperm.slane %v441, 0
      %v571 = vperm.slane %v441, 1
      %v574 = vmul.f32 %v567, %v570
      %v575 = vmul.f32 %v568, %v571
      %v576 = vmul.f32 %v574, %v464
      %v577 = vmul.f32 %v575, %v465
      %578 = vset.pattern.permute.xlu0 6
      %579 = vperm.xlu0 %578, %v446
      %v580 = vpop.permute.xlu0 %579
      %v582 = vmul.f32 %v576, %v580
      %v583 = vmul.f32 %v577, %v580
      %v584 = vadd.f32 %v560, %v582
      %v585 = vadd.f32 %v561, %v583
      %586 = vrot.lane.b32.xlu0 %v437, 96
      %v587 = vpop.permute.xlu0 %586
      %588 = vrot.lane.b32.xlu0 %v438, 96
      %v589 = vpop.permute.xlu0 %588
      %vm590 = vcmp.lt.s32.totalorder %v452, 96
      %v591 = vsel %vm590, %v587, %v589
      %v592 = vsel %vm590, %v589, %v587
      %v593 = vmul.f32 %v591, %v570
      %v594 = vmul.f32 %v592, %v571
      %595 = vset.pattern.permute.xlu0 7
      %596 = vperm.xlu0 %595, %v446
      %v597 = vpop.permute.xlu0 %596
      %v599 = vmul.f32 %v593, %v597
      %v600 = vmul.f32 %v594, %v597
      %v601 = vadd.f32 %v584, %v599
      %v602 = vadd.f32 %v585, %v600
      %603 = vrot.lane.b32.xlu0 %v437, 94
      %v604 = vpop.permute.xlu0 %603
      %605 = vrot.lane.b32.xlu0 %v438, 94
      %v606 = vpop.permute.xlu0 %605
      %vm607 = vcmp.lt.s32.totalorder %v452, 94
      %v608 = vsel %vm607, %v604, %v606
      %v609 = vsel %vm607, %v606, %v604
      %v610 = vmul.f32 %v608, %v570
      %v611 = vmul.f32 %v609, %v571
      %v612 = vmul.f32 %v610, %v506
      %v613 = vmul.f32 %v611, %v507
      %614 = vset.pattern.permute.xlu0 8
      %615 = vperm.xlu0 %614, %v446
      %v616 = vpop.permute.xlu0 %615
      %v618 = vmul.f32 %v612, %v616
      %v619 = vmul.f32 %v613, %v616
      %v620 = vadd.f32 %v601, %v618
      %v621 = vadd.f32 %v602, %v619
      %v622 = vld [vmem:[%s5] sm:$0xff]
      %624 = vset.pattern.permute.xlu0 0
      %625 = vperm.xlu0 %624, %v622
      %v626 = vpop.permute.xlu0 %625
      %v628 = vadd.f32 %v620, %v626
      %v629 = vadd.f32 %v621, %v626
      %v630 = vld [vmem:[%s6] sm:$0xff]
      %v631 = vld [vmem:[%s7] sm:$0xff]
      %633 = vset.pattern.permute.xlu0 0
      %634 = vperm.xlu0 %633, %v631
      %v635 = vpop.permute.xlu0 %634
      %v637 = vadd.f32 %v635, 0.0
      %v638 = vperm.slane %v628, 0
      %v639 = vperm.slane %v629, 0
      %641 = vset.pattern.permute.xlu0 0
      %642 = vperm.xlu0 %641, %v630
      %v643 = vpop.permute.xlu0 %642
      %v645 = vmul.f32 %v638, %v643
      %v646 = vmul.f32 %v639, %v643
      %v647 = vadd.f32 %v637, %v645
      %v648 = vadd.f32 %v637, %v646
      %v649 = vperm.slane %v628, 1
      %v650 = vperm.slane %v629, 1
      %651 = vset.pattern.permute.xlu0 1
      %652 = vperm.xlu0 %651, %v630
      %v653 = vpop.permute.xlu0 %652
      %v655 = vmul.f32 %v649, %v653
      %v656 = vmul.f32 %v650, %v653
      %v657 = vadd.f32 %v647, %v655
      %v658 = vadd.f32 %v648, %v656
      %v659 = vperm.slane %v628, 2
      %v660 = vperm.slane %v629, 2
      %661 = vset.pattern.permute.xlu0 2
      %662 = vperm.xlu0 %661, %v630
      %v663 = vpop.permute.xlu0 %662
      %v665 = vmul.f32 %v659, %v663
      %v666 = vmul.f32 %v660, %v663
      %v667 = vadd.f32 %v657, %v665
      %v668 = vadd.f32 %v658, %v666
      %v669 = vperm.slane %v628, 3
      %v670 = vperm.slane %v629, 3
      %671 = vset.pattern.permute.xlu0 3
      %672 = vperm.xlu0 %671, %v630
      %v673 = vpop.permute.xlu0 %672
      %v675 = vmul.f32 %v669, %v673
      %v676 = vmul.f32 %v670, %v673
      %v677 = vadd.f32 %v667, %v675
      %v678 = vadd.f32 %v668, %v676
      %v679 = vperm.slane %v628, 4
      %v680 = vperm.slane %v629, 4
      %681 = vset.pattern.permute.xlu0 4
      %682 = vperm.xlu0 %681, %v630
      %v683 = vpop.permute.xlu0 %682
      %v685 = vmul.f32 %v679, %v683
      %v686 = vmul.f32 %v680, %v683
      %v687 = vadd.f32 %v677, %v685
      %v688 = vadd.f32 %v678, %v686
      %v689 = vperm.slane %v628, 5
      %v690 = vperm.slane %v629, 5
      %691 = vset.pattern.permute.xlu0 5
      %692 = vperm.xlu0 %691, %v630
      %v693 = vpop.permute.xlu0 %692
      %v695 = vmul.f32 %v689, %v693
      %v696 = vmul.f32 %v690, %v693
      %v697 = vadd.f32 %v687, %v695
      %v698 = vadd.f32 %v688, %v696
      %v699 = vperm.slane %v628, 6
      %v700 = vperm.slane %v629, 6
      %701 = vset.pattern.permute.xlu0 6
      %702 = vperm.xlu0 %701, %v630
      %v703 = vpop.permute.xlu0 %702
      %v705 = vmul.f32 %v699, %v703
      %v706 = vmul.f32 %v700, %v703
      %v707 = vadd.f32 %v697, %v705
      %v708 = vadd.f32 %v698, %v706
      %v709 = vperm.slane %v628, 7
      %v710 = vperm.slane %v629, 7
      %711 = vset.pattern.permute.xlu0 7
      %712 = vperm.xlu0 %711, %v630
      %v713 = vpop.permute.xlu0 %712
      %v715 = vmul.f32 %v709, %v713
      %v716 = vmul.f32 %v710, %v713
      %v717 = vadd.f32 %v707, %v715
      %v718 = vadd.f32 %v708, %v716
      %719 = vst [vmem:[%s372] sm:$0xff] %v717
      %720 = vst [vmem:[%s372 + $0x8] sm:$0xff] %v718
      %v721 = vadd.f32 %v717, %v718
      %722 = vadd.xlane.f32.xlu0 %v721
      %v723 = vpop.xlane.xlu0 %722
      %vm724 = vcmask 7168
      %725 = vst.msk [vmem:[%s376] sm:$0xff] %vm724, %v723
      %v726 = vmul.f32 %v717, %v717
      %v727 = vmul.f32 %v718, %v718
      %v728 = vadd.f32 %v726, %v727
      %729 = vadd.xlane.f32.xlu0 %v728
      %v730 = vpop.xlane.xlu0 %729
      %731 = vst.msk [vmem:[%s380] sm:$0xff] %vm724, %v730
      %p732 = scmp.lt.s32.totalorder %s22, 1
      %s733 = scalar_select %p732, %s22, 1
      %s734 = smul.addr %s733, 2
      %s735 = smul.addr %s734, 8
      %s736 = scalar_lea.vmem %s8, %s735
      %p737 = scmp.lt.s32.totalorder %s22, 1
      %s738 = scalar_select %p737, %s22, 1
      %s739 = smul.addr %s738, 8
      %s740 = scalar_lea.vmem %s9, %s739
      %p741 = scmp.lt.s32.totalorder %s22, 1
      %s742 = scalar_select %p741, %s22, 1
      %s743 = smul.addr %s742, 8
      %s744 = scalar_lea.vmem %s10, %s743
      // Predicated region
      $region53: #{double_conv_dwsep_with_dilation.3} parent=51 // pred_check
        %p745 = pneg %p213
      $region54: #{double_conv_dwsep_with_dilation.3} parent=51 // pred_check_branch
        %747 = sbr.rel (%p745) target = $region56
      $region55: #{double_conv_dwsep_with_dilation.3} parent=51 // pred_region
        _
      $region56: #{double_conv_dwsep_with_dilation.3} parent=51 // pred_fallthru
        _
      // Predicated region
      $region57: #{double_conv_dwsep_with_dilation.3} parent=51 // pred_check
        %p748 = pneg %p239
      $region58: #{double_conv_dwsep_with_dilation.3} parent=51 // pred_check_branch
        %750 = sbr.rel (%p748) target = $region60
      $region59: #{double_conv_dwsep_with_dilation.3} parent=51 // pred_region
        _
      $region60: #{double_conv_dwsep_with_dilation.3} parent=51 // pred_fallthru
        _
      // Predicated region
      $region61: #{double_conv_dwsep_with_dilation.3} parent=51 // pred_check
        %p751 = pneg %p265
      $region62: #{double_conv_dwsep_with_dilation.3} parent=51 // pred_check_branch
        %753 = sbr.rel (%p751) target = $region64
      $region63: #{double_conv_dwsep_with_dilation.3} parent=51 // pred_region
        _
      $region64: #{double_conv_dwsep_with_dilation.3} parent=51 // pred_fallthru
        _
    $region52: #{double_conv_dwsep_with_dilation.3} parent=5 // pred_fallthru
      _
    %p754 = scmp.le.s32.totalorder 2, %s17
    // Predicated region
    $region65: #{double_conv_dwsep_with_dilation.3} parent=5 // pred_check
      %p755 = pneg %p754
    $region66: #{double_conv_dwsep_with_dilation.3} parent=5 // pred_check_branch
      %757 = sbr.rel (%p755) target = $region68
    $region67: #{double_conv_dwsep_with_dilation.3} parent=5 // pred_region
      %s758 = ssub.s32 %s17, 2
      // Predicated region
      $region69: #{double_conv_dwsep_with_dilation.3} parent=67 // pred_check
        %p759 = pneg %p219
      $region70: #{double_conv_dwsep_with_dilation.3} parent=67 // pred_check_branch
        %761 = sbr.rel (%p759) target = $region72
      $region71: #{double_conv_dwsep_with_dilation.3} parent=67 // pred_region
        %p762 = scmp.lt.s32.totalorder %s23, 1
        %s763 = scalar_select %p762, %s23, 1
        %s764 = smul.addr %s763, 2
        %s765 = smul.addr %s764, 8
        %s766 = scalar_lea.vmem %s8, %s765
      $region72: #{double_conv_dwsep_with_dilation.3} parent=67 // pred_fallthru
        _
      // Predicated region
      $region73: #{double_conv_dwsep_with_dilation.3} parent=67 // pred_check
        %p767 = pneg %p245
      $region74: #{double_conv_dwsep_with_dilation.3} parent=67 // pred_check_branch
        %769 = sbr.rel (%p767) target = $region76
      $region75: #{double_conv_dwsep_with_dilation.3} parent=67 // pred_region
        %p770 = scmp.lt.s32.totalorder %s23, 1
        %s771 = scalar_select %p770, %s23, 1
        %s772 = smul.addr %s771, 8
        %s773 = scalar_lea.vmem %s9, %s772
      $region76: #{double_conv_dwsep_with_dilation.3} parent=67 // pred_fallthru
        _
      // Predicated region
      $region77: #{double_conv_dwsep_with_dilation.3} parent=67 // pred_check
        %p774 = pneg %p271
      $region78: #{double_conv_dwsep_with_dilation.3} parent=67 // pred_check_branch
        %776 = sbr.rel (%p774) target = $region80
      $region79: #{double_conv_dwsep_with_dilation.3} parent=67 // pred_region
        %p777 = scmp.lt.s32.totalorder %s23, 1
        %s778 = scalar_select %p777, %s23, 1
        %s779 = smul.addr %s778, 8
        %s780 = scalar_lea.vmem %s10, %s779
      $region80: #{double_conv_dwsep_with_dilation.3} parent=67 // pred_fallthru
        _
    $region68: #{double_conv_dwsep_with_dilation.3} parent=5 // pred_fallthru
      _
  $region6: #{double_conv_dwsep_with_dilation.3} parent=0 // loop_footer
    %s21 = sadd.s32 1, %s17
  $region7: #{double_conv_dwsep_with_dilation.3} parent=0 // loop_footer_branch
    %16 = sbr.rel target = $region3
  $region8: #{double_conv_dwsep_with_dilation.3} parent=0 // loop_exit
    _

</llo_original>
